<compile_context>
chip_gen: v6e
topology: v6e:2x2x1
jax: 0.10.0
libtpu: 0.0.40
codegen_flags: <defaults>
</compile_context>

<pallas_src>
import functools

import jax
import jax.numpy as jnp
from jax.experimental import pallas as pl
from jax.experimental.pallas import tpu as pltpu

IN_DIM = 28 * 28          # 784
HIDDEN = 200              # logical hidden width (PyTorch)
HIDDEN_PAD = 256          # lane-aligned hidden width used inside the kernel
SUBLANE = 16              # bf16 sublane packing (also a multiple of 8 for f32 inputs)
MAX_TB = 512              # batch-tile cap (VMEM headroom incl. v7x's 64 MiB / 32 MiB scoped)


def _round_up(n, m):
    return ((n + m - 1) // m) * m


# --------------------------------------------------------------------------------------
# Kernel
# --------------------------------------------------------------------------------------
def _logic_vae_kernel(
    x_ref,
    w1_ref, b1_ref,
    w2_ref, b2_ref,
    w3_ref, b3_ref,
    w4_ref, b4_ref,
    w5_ref, b5_ref,
    w6_ref, b6_ref,
    recon_ref, z_ref,
):
    bf16 = jnp.bfloat16
    f32 = jnp.float32

    x = x_ref[...].astype(bf16)   # no-op cast if x is already bf16

    # ---- encoder ----
    h = jnp.dot(x, w1_ref[...], preferred_element_type=f32) + b1_ref[...]
    h = jnp.maximum(h, 0.0)
    h = jnp.dot(h.astype(bf16), w2_ref[...], preferred_element_type=f32) + b2_ref[...]
    h = jnp.maximum(h, 0.0)
    z = jnp.dot(h.astype(bf16), w3_ref[...], preferred_element_type=f32) + b3_ref[...]
    # _sample_z is identity.
    z_ref[...] = z.astype(z_ref.dtype)

    # ---- decoder ----
    d = jnp.dot(z.astype(bf16), w4_ref[...], preferred_element_type=f32) + b4_ref[...]
    d = jnp.maximum(d, 0.0)
    d = jnp.dot(d.astype(bf16), w5_ref[...], preferred_element_type=f32) + b5_ref[...]
    d = jnp.maximum(d, 0.0)
    logits = jnp.dot(d.astype(bf16), w6_ref[...], preferred_element_type=f32) + b6_ref[...]
    # sigmoid(x) == 0.5 * (tanh(0.5 * x) + 1): a single EUP op per element.
    recon = 0.5 * (jnp.tanh(0.5 * logits) + 1.0)
    recon_ref[...] = recon.astype(recon_ref.dtype)


# --------------------------------------------------------------------------------------
# Params
# --------------------------------------------------------------------------------------
def init_params(key, z_dim):
    """Deterministic init matching the nn.Linear shapes of Logic_VAE.

    Weights are stored transposed relative to PyTorch ([in, out]) so the kernel
    computes x @ W + b directly. Biases are [1, out] rows.
    """
    dims = [
        (IN_DIM, HIDDEN),   # dense_enc1
        (HIDDEN, HIDDEN),   # dense_enc2
        (HIDDEN, z_dim),    # z_layer
        (z_dim, HIDDEN),    # dense_dec1
        (HIDDEN, HIDDEN),   # dense_dec2
        (HIDDEN, IN_DIM),   # dense_dec3
    ]
    params = {}
    keys = jax.random.split(key, 2 * len(dims))
    for i, (fan_in, fan_out) in enumerate(dims):
        bound = 1.0 / jnp.sqrt(fan_in)
        params[f"w{i + 1}"] = jax.random.uniform(
            keys[2 * i], (fan_in, fan_out), jnp.float32, minval=-bound, maxval=bound
        )
        params[f"b{i + 1}"] = jax.random.uniform(
            keys[2 * i + 1], (1, fan_out), jnp.float32, minval=-bound, maxval=bound
        )
    return params


def prepare_params(params):
    """Zero-pad to lane-aligned widths and cast weights to bf16 (done once, outside jit).

    hidden 200 -> 256, z_dim -> round_up(z_dim, 128). Padding is with real zeros so the
    padded columns/rows contribute nothing (relu(0)=0; padded z lanes are sliced away).
    """
    z_dim = params["w3"].shape[1]
    zp = _round_up(max(z_dim, 1), 128)

    def pad2(a, rows, cols, dtype):
        a = jnp.pad(a, ((0, rows - a.shape[0]), (0, cols - a.shape[1])))
        return a.astype(dtype)

    bf16, f32 = jnp.bfloat16, jnp.float32
    return {
        "w1": pad2(params["w1"], IN_DIM, HIDDEN_PAD, bf16),
        "b1": pad2(params["b1"], 1, HIDDEN_PAD, f32),
        "w2": pad2(params["w2"], HIDDEN_PAD, HIDDEN_PAD, bf16),
        "b2": pad2(params["b2"], 1, HIDDEN_PAD, f32),
        "w3": pad2(params["w3"], HIDDEN_PAD, zp, bf16),
        "b3": pad2(params["b3"], 1, zp, f32),
        "w4": pad2(params["w4"], zp, HIDDEN_PAD, bf16),
        "b4": pad2(params["b4"], 1, HIDDEN_PAD, f32),
        "w5": pad2(params["w5"], HIDDEN_PAD, HIDDEN_PAD, bf16),
        "b5": pad2(params["b5"], 1, HIDDEN_PAD, f32),
        "w6": pad2(params["w6"], HIDDEN_PAD, IN_DIM, bf16),
        "b6": pad2(params["b6"], 1, IN_DIM, f32),
    }


# --------------------------------------------------------------------------------------
# Batch-tile selection
# --------------------------------------------------------------------------------------
def _choose_batch_tile(B):
    """Pick TB: multiple of SUBLANE, <= MAX_TB, dividing B when possible (no pad/slice
    HBM passes), and giving >=2 grid steps when B allows (so v7x's 2 TCs both get work)."""
    if B <= SUBLANE:
        return B  # full-array block (block_shape == array dims is always legal)
    divisors = [t for t in range(SUBLANE, min(MAX_TB, B) + 1, SUBLANE) if B % t == 0]
    two_step = [t for t in divisors if B // t >= 2]
    if two_step:
        return max(two_step)
    if divisors:
        return max(divisors)
    # Ragged B: fall back to padding. Aim for >=2 steps, <= MAX_TB rows.
    return min(MAX_TB, _round_up(max(-(-B // 2), SUBLANE), SUBLANE))


# --------------------------------------------------------------------------------------
# Forward wrapper
# --------------------------------------------------------------------------------------
@functools.partial(jax.jit, static_argnames=("z_dim",))
def logic_vae_forward(x, prepared, z_dim):
    """x: [B, 784] (bf16 preferred, f32 accepted); prepared: prepare_params output.

    Returns (recon [B,784] bf16, z [B,z_dim] bf16)."""
    B = x.shape[0]
    zp = prepared["w3"].shape[1]

    TB = _choose_batch_tile(B)
    B_pad = _round_up(B, TB)
    x_p = x if B_pad == B else jnp.pad(x, ((0, B_pad - B), (0, 0)))
    grid = (B_pad // TB,)

    weight_args = (
        prepared["w1"], prepared["b1"],
        prepared["w2"], prepared["b2"],
        prepared["w3"], prepared["b3"],
        prepared["w4"], prepared["b4"],
        prepared["w5"], prepared["b5"],
        prepared["w6"], prepared["b6"],
    )

    def resident_spec(a):
        # Full-array block, constant block index -> DMA'd once, stays resident in VMEM.
        return pl.BlockSpec(a.shape, lambda i: (0, 0))

    in_specs = [pl.BlockSpec((TB, IN_DIM), lambda i: (i, 0))] + [
        resident_spec(a) for a in weight_args
    ]
    out_specs = (
        pl.BlockSpec((TB, IN_DIM), lambda i: (i, 0)),
        pl.BlockSpec((TB, zp), lambda i: (i, 0)),
    )

    # Advisory cost estimate (padded shapes).
    flops = 2 * B_pad * (
        IN_DIM * HIDDEN_PAD
        + HIDDEN_PAD * HIDDEN_PAD
        + HIDDEN_PAD * zp
        + zp * HIDDEN_PAD
        + HIDDEN_PAD * HIDDEN_PAD
        + HIDDEN_PAD * IN_DIM
    )
    param_bytes = sum(int(a.size) * a.dtype.itemsize for a in weight_args)
    bytes_accessed = (
        B_pad * IN_DIM * x.dtype.itemsize   # x in
        + B_pad * IN_DIM * 2                # recon out (bf16)
        + B_pad * zp * 2                    # z out (bf16)
        + param_bytes
    )
    cost = pl.CostEstimate(
        flops=int(flops),
        transcendentals=int(B_pad * IN_DIM),   # tanh in the sigmoid epilogue
        bytes_accessed=int(bytes_accessed),
    )

    recon_pad, z_pad = pl.pallas_call(
        _logic_vae_kernel,
        out_shape=(
            jax.ShapeDtypeStruct((B_pad, IN_DIM), jnp.bfloat16),
            jax.ShapeDtypeStruct((B_pad, zp), jnp.bfloat16),
        ),
        grid=grid,
        in_specs=in_specs,
        out_specs=out_specs,
        compiler_params=pltpu.CompilerParams(
            dimension_semantics=("parallel",),
            vmem_limit_bytes=32 * 1024 * 1024,
        ),
        cost_estimate=cost,
    )(x_p, *weight_args)

    recon = recon_pad if B_pad == B else recon_pad[:B]
    z = z_pad[:B, :z_dim] if (B_pad != B or zp != z_dim) else z_pad
    return recon, z


# --------------------------------------------------------------------------------------
# References (for correctness checks)
# --------------------------------------------------------------------------------------
def _reference_forward_f32(x, params):
    """Plain-JAX f32 reference (exact module semantics)."""
    h = jax.nn.relu(x @ params["w1"] + params["b1"])
    h = jax.nn.relu(h @ params["w2"] + params["b2"])
    z = h @ params["w3"] + params["b3"]
    d = jax.nn.relu(z @ params["w4"] + params["b4"])
    d = jax.nn.relu(d @ params["w5"] + params["b5"])
    recon = jax.nn.sigmoid(d @ params["w6"] + params["b6"])
    return recon, z


def _reference_forward_prepared(x, p, z_dim):
    """Plain-JAX reference using the same padded bf16 params / f32 accumulation as the kernel."""
    bf16, f32 = jnp.bfloat16, jnp.float32

    def mm(a, w):
        return jnp.dot(a.astype(bf16), w, preferred_element_type=f32)

    h = jax.nn.relu(mm(x.astype(f32), p["w1"]) + p["b1"])
    h = jax.nn.relu(mm(h, p["w2"]) + p["b2"])
    z = mm(h, p["w3"]) + p["b3"]
    d = jax.nn.relu(mm(z, p["w4"]) + p["b4"])
    d = jax.nn.relu(mm(d, p["w5"]) + p["b5"])
    recon = jax.nn.sigmoid(mm(d, p["w6"]) + p["b6"])
    return recon, z[:, :z_dim]


# --------------------------------------------------------------------------------------
# Demo / test
# --------------------------------------------------------------------------------------
if __name__ == "__main__":
    key = jax.random.PRNGKey(0)
    k_params, k_x = jax.random.split(key)

    B = 16
    Z_DIM = 32
    params = init_params(k_params, Z_DIM)
    prepared = prepare_params(params)
    # Producer supplies x in bf16 (no wrapper-side cast pass).
    x = jax.random.uniform(k_x, (B, IN_DIM), jnp.float32).astype(jnp.bfloat16)

    recon, z = logic_vae_forward(x, prepared, Z_DIM)
    recon = jax.block_until_ready(recon)
    z = jax.block_until_ready(z)

    assert recon.shape == (B, IN_DIM) and z.shape == (B, Z_DIM)
    assert recon.dtype == jnp.bfloat16 and z.dtype == jnp.bfloat16

    recon_f32 = recon.astype(jnp.float32)
    z_f32 = z.astype(jnp.float32)

    # Tight check: same bf16 weights / f32 accumulation as the kernel (bf16 output rounding).
    recon_p, z_p = _reference_forward_prepared(x, prepared, Z_DIM)
    assert jnp.allclose(recon_f32, recon_p, atol=2e-2, rtol=2e-2)
    assert jnp.allclose(z_f32, z_p, atol=2e-2, rtol=2e-2)

    # Looser check against exact f32 module semantics (bf16 weight/activation quantization).
    recon_f, z_f = _reference_forward_f32(x.astype(jnp.float32), params)
    assert jnp.allclose(recon_f32, recon_f, atol=6e-2, rtol=6e-2)
    assert jnp.allclose(z_f32, z_f, atol=6e-2, rtol=6e-2)

    print("KERNEL_OK")
</pallas_src>

<mosaic_0001>
module attributes {stable_mosaic.version = 11 : i64} {
  func.func @_logic_vae_kernel(%arg0: i32, %arg1: memref<16x784xbf16, #tpu.memory_space<vmem>>, %arg2: memref<784x256xbf16, #tpu.memory_space<vmem>>, %arg3: memref<1x256xf32, #tpu.memory_space<vmem>>, %arg4: memref<256x256xbf16, #tpu.memory_space<vmem>>, %arg5: memref<1x256xf32, #tpu.memory_space<vmem>>, %arg6: memref<256x128xbf16, #tpu.memory_space<vmem>>, %arg7: memref<1x128xf32, #tpu.memory_space<vmem>>, %arg8: memref<128x256xbf16, #tpu.memory_space<vmem>>, %arg9: memref<1x256xf32, #tpu.memory_space<vmem>>, %arg10: memref<256x256xbf16, #tpu.memory_space<vmem>>, %arg11: memref<1x256xf32, #tpu.memory_space<vmem>>, %arg12: memref<256x784xbf16, #tpu.memory_space<vmem>>, %arg13: memref<1x784xf32, #tpu.memory_space<vmem>>, %arg14: memref<16x784xbf16, #tpu.memory_space<vmem>>, %arg15: memref<16x128xbf16, #tpu.memory_space<vmem>>) attributes {dimension_semantics = [#tpu.dimension_semantics<parallel>], iteration_bounds = array<i64: 1>, scalar_prefetch = 0 : i64, scratch_operands = 0 : i64, tpu.core_type = #tpu.core_type<tc>, window_params = [{transform_indices = @transform_0, window_bounds = array<i64: 16, 784>}, {pipeline_mode = #tpu.pipeline_mode<synchronous>, transform_indices = @transform_1, window_bounds = array<i64: 784, 256>}, {pipeline_mode = #tpu.pipeline_mode<synchronous>, transform_indices = @transform_2, window_bounds = array<i64: 1, 256>}, {pipeline_mode = #tpu.pipeline_mode<synchronous>, transform_indices = @transform_3, window_bounds = array<i64: 256, 256>}, {pipeline_mode = #tpu.pipeline_mode<synchronous>, transform_indices = @transform_4, window_bounds = array<i64: 1, 256>}, {pipeline_mode = #tpu.pipeline_mode<synchronous>, transform_indices = @transform_5, window_bounds = array<i64: 256, 128>}, {pipeline_mode = #tpu.pipeline_mode<synchronous>, transform_indices = @transform_6, window_bounds = array<i64: 1, 128>}, {pipeline_mode = #tpu.pipeline_mode<synchronous>, transform_indices = @transform_7, window_bounds = array<i64: 128, 256>}, {pipeline_mode = #tpu.pipeline_mode<synchronous>, transform_indices = @transform_8, window_bounds = array<i64: 1, 256>}, {pipeline_mode = #tpu.pipeline_mode<synchronous>, transform_indices = @transform_9, window_bounds = array<i64: 256, 256>}, {pipeline_mode = #tpu.pipeline_mode<synchronous>, transform_indices = @transform_10, window_bounds = array<i64: 1, 256>}, {pipeline_mode = #tpu.pipeline_mode<synchronous>, transform_indices = @transform_11, window_bounds = array<i64: 256, 784>}, {pipeline_mode = #tpu.pipeline_mode<synchronous>, transform_indices = @transform_12, window_bounds = array<i64: 1, 784>}, {transform_indices = @transform_13, window_bounds = array<i64: 16, 784>}, {transform_indices = @transform_14, window_bounds = array<i64: 16, 128>}]} {
    %c0 = arith.constant 0 : index
    %c0_0 = arith.constant 0 : index
    %0 = vector.load %arg1[%c0, %c0_0] : memref<16x784xbf16, #tpu.memory_space<vmem>>, vector<16x784xbf16>
    %c0_1 = arith.constant 0 : index
    %c0_2 = arith.constant 0 : index
    %1 = vector.load %arg2[%c0_1, %c0_2] : memref<784x256xbf16, #tpu.memory_space<vmem>>, vector<784x256xbf16>
    %cst = arith.constant dense<0.000000e+00> : vector<16x256xf32>
    %2 = tpu.matmul %0, %1, %cst {dimension_numbers = #tpu.dot_dimension_numbers<[1], [0], [0], [1], [0, 0, 1, 1], [], []>} : vector<16x784xbf16>, vector<784x256xbf16>, vector<16x256xf32> -> vector<16x256xf32>
    %c0_3 = arith.constant 0 : index
    %c0_4 = arith.constant 0 : index
    %3 = vector.load %arg3[%c0_3, %c0_4] : memref<1x256xf32, #tpu.memory_space<vmem>>, vector<1x256xf32>
    %4 = vector.broadcast %3 : vector<1x256xf32> to vector<16x256xf32>
    %5 = arith.addf %2, %4 : vector<16x256xf32>
    %cst_5 = arith.constant 0.000000e+00 : f32
    %6 = vector.broadcast %cst_5 : f32 to vector<16x256xf32>
    %7 = arith.maximumf %5, %6 : vector<16x256xf32>
    %8 = arith.truncf %7 : vector<16x256xf32> to vector<16x256xbf16>
    %c0_6 = arith.constant 0 : index
    %c0_7 = arith.constant 0 : index
    %9 = vector.load %arg4[%c0_6, %c0_7] : memref<256x256xbf16, #tpu.memory_space<vmem>>, vector<256x256xbf16>
    %cst_8 = arith.constant dense<0.000000e+00> : vector<16x256xf32>
    %10 = tpu.matmul %8, %9, %cst_8 {dimension_numbers = #tpu.dot_dimension_numbers<[1], [0], [0], [1], [0, 0, 1, 1], [], []>} : vector<16x256xbf16>, vector<256x256xbf16>, vector<16x256xf32> -> vector<16x256xf32>
    %c0_9 = arith.constant 0 : index
    %c0_10 = arith.constant 0 : index
    %11 = vector.load %arg5[%c0_9, %c0_10] : memref<1x256xf32, #tpu.memory_space<vmem>>, vector<1x256xf32>
    %12 = vector.broadcast %11 : vector<1x256xf32> to vector<16x256xf32>
    %13 = arith.addf %10, %12 : vector<16x256xf32>
    %cst_11 = arith.constant 0.000000e+00 : f32
    %14 = vector.broadcast %cst_11 : f32 to vector<16x256xf32>
    %15 = arith.maximumf %13, %14 : vector<16x256xf32>
    %16 = arith.truncf %15 : vector<16x256xf32> to vector<16x256xbf16>
    %c0_12 = arith.constant 0 : index
    %c0_13 = arith.constant 0 : index
    %17 = vector.load %arg6[%c0_12, %c0_13] : memref<256x128xbf16, #tpu.memory_space<vmem>>, vector<256x128xbf16>
    %cst_14 = arith.constant dense<0.000000e+00> : vector<16x128xf32>
    %18 = tpu.matmul %16, %17, %cst_14 {dimension_numbers = #tpu.dot_dimension_numbers<[1], [0], [0], [1], [0, 0, 1, 1], [], []>} : vector<16x256xbf16>, vector<256x128xbf16>, vector<16x128xf32> -> vector<16x128xf32>
    %c0_15 = arith.constant 0 : index
    %c0_16 = arith.constant 0 : index
    %19 = vector.load %arg7[%c0_15, %c0_16] : memref<1x128xf32, #tpu.memory_space<vmem>>, vector<1x128xf32>
    %20 = vector.broadcast %19 : vector<1x128xf32> to vector<16x128xf32>
    %21 = arith.addf %18, %20 : vector<16x128xf32>
    %22 = arith.truncf %21 : vector<16x128xf32> to vector<16x128xbf16>
    %c0_17 = arith.constant 0 : index
    %c0_18 = arith.constant 0 : index
    %23 = vector.load %arg15[%c0_17, %c0_18] : memref<16x128xbf16, #tpu.memory_space<vmem>>, vector<16x128xbf16>
    tpu.vector_store %arg15[%c0_17, %c0_18], %22 {strides = array<i32>} : memref<16x128xbf16, #tpu.memory_space<vmem>>, vector<16x128xbf16>,
    %24 = arith.truncf %21 : vector<16x128xf32> to vector<16x128xbf16>
    %c0_19 = arith.constant 0 : index
    %c0_20 = arith.constant 0 : index
    %25 = vector.load %arg8[%c0_19, %c0_20] : memref<128x256xbf16, #tpu.memory_space<vmem>>, vector<128x256xbf16>
    %cst_21 = arith.constant dense<0.000000e+00> : vector<16x256xf32>
    %26 = tpu.matmul %24, %25, %cst_21 {dimension_numbers = #tpu.dot_dimension_numbers<[1], [0], [0], [1], [0, 0, 1, 1], [], []>} : vector<16x128xbf16>, vector<128x256xbf16>, vector<16x256xf32> -> vector<16x256xf32>
    %c0_22 = arith.constant 0 : index
    %c0_23 = arith.constant 0 : index
    %27 = vector.load %arg9[%c0_22, %c0_23] : memref<1x256xf32, #tpu.memory_space<vmem>>, vector<1x256xf32>
    %28 = vector.broadcast %27 : vector<1x256xf32> to vector<16x256xf32>
    %29 = arith.addf %26, %28 : vector<16x256xf32>
    %cst_24 = arith.constant 0.000000e+00 : f32
    %30 = vector.broadcast %cst_24 : f32 to vector<16x256xf32>
    %31 = arith.maximumf %29, %30 : vector<16x256xf32>
    %32 = arith.truncf %31 : vector<16x256xf32> to vector<16x256xbf16>
    %c0_25 = arith.constant 0 : index
    %c0_26 = arith.constant 0 : index
    %33 = vector.load %arg10[%c0_25, %c0_26] : memref<256x256xbf16, #tpu.memory_space<vmem>>, vector<256x256xbf16>
    %cst_27 = arith.constant dense<0.000000e+00> : vector<16x256xf32>
    %34 = tpu.matmul %32, %33, %cst_27 {dimension_numbers = #tpu.dot_dimension_numbers<[1], [0], [0], [1], [0, 0, 1, 1], [], []>} : vector<16x256xbf16>, vector<256x256xbf16>, vector<16x256xf32> -> vector<16x256xf32>
    %c0_28 = arith.constant 0 : index
    %c0_29 = arith.constant 0 : index
    %35 = vector.load %arg11[%c0_28, %c0_29] : memref<1x256xf32, #tpu.memory_space<vmem>>, vector<1x256xf32>
    %36 = vector.broadcast %35 : vector<1x256xf32> to vector<16x256xf32>
    %37 = arith.addf %34, %36 : vector<16x256xf32>
    %cst_30 = arith.constant 0.000000e+00 : f32
    %38 = vector.broadcast %cst_30 : f32 to vector<16x256xf32>
    %39 = arith.maximumf %37, %38 : vector<16x256xf32>
    %40 = arith.truncf %39 : vector<16x256xf32> to vector<16x256xbf16>
    %c0_31 = arith.constant 0 : index
    %c0_32 = arith.constant 0 : index
    %41 = vector.load %arg12[%c0_31, %c0_32] : memref<256x784xbf16, #tpu.memory_space<vmem>>, vector<256x784xbf16>
    %cst_33 = arith.constant dense<0.000000e+00> : vector<16x784xf32>
    %42 = tpu.matmul %40, %41, %cst_33 {dimension_numbers = #tpu.dot_dimension_numbers<[1], [0], [0], [1], [0, 0, 1, 1], [], []>} : vector<16x256xbf16>, vector<256x784xbf16>, vector<16x784xf32> -> vector<16x784xf32>
    %c0_34 = arith.constant 0 : index
    %c0_35 = arith.constant 0 : index
    %43 = vector.load %arg13[%c0_34, %c0_35] : memref<1x784xf32, #tpu.memory_space<vmem>>, vector<1x784xf32>
    %44 = vector.broadcast %43 : vector<1x784xf32> to vector<16x784xf32>
    %45 = arith.addf %42, %44 : vector<16x784xf32>
    %cst_36 = arith.constant 5.000000e-01 : f32
    %46 = vector.broadcast %cst_36 : f32 to vector<16x784xf32>
    %47 = arith.mulf %46, %45 : vector<16x784xf32>
    %48 = math.tanh %47 : vector<16x784xf32>
    %cst_37 = arith.constant 1.000000e+00 : f32
    %49 = vector.broadcast %cst_37 : f32 to vector<16x784xf32>
    %50 = arith.addf %48, %49 : vector<16x784xf32>
    %cst_38 = arith.constant 5.000000e-01 : f32
    %51 = vector.broadcast %cst_38 : f32 to vector<16x784xf32>
    %52 = arith.mulf %51, %50 : vector<16x784xf32>
    %53 = arith.truncf %52 : vector<16x784xf32> to vector<16x784xbf16>
    %c0_39 = arith.constant 0 : index
    %c0_40 = arith.constant 0 : index
    %54 = vector.load %arg14[%c0_39, %c0_40] : memref<16x784xbf16, #tpu.memory_space<vmem>>, vector<16x784xbf16>
    tpu.vector_store %arg14[%c0_39, %c0_40], %53 {strides = array<i32>} : memref<16x784xbf16, #tpu.memory_space<vmem>>, vector<16x784xbf16>,
    return
  }
  func.func @transform_0(%arg0: i32) -> (i32, i32) {
    %c0_i32 = arith.constant 0 : i32
    %c0_i32_0 = arith.constant 0 : i32
    return %arg0, %c0_i32 : i32, i32
  }
  func.func @transform_1(%arg0: i32) -> (i32, i32) {
    %c0_i32 = arith.constant 0 : i32
    %c0_i32_0 = arith.constant 0 : i32
    %c0_i32_1 = arith.constant 0 : i32
    return %c0_i32, %c0_i32_0 : i32, i32
  }
  func.func @transform_2(%arg0: i32) -> (i32, i32) {
    %c0_i32 = arith.constant 0 : i32
    %c0_i32_0 = arith.constant 0 : i32
    %c0_i32_1 = arith.constant 0 : i32
    return %c0_i32, %c0_i32_0 : i32, i32
  }
  func.func @transform_3(%arg0: i32) -> (i32, i32) {
    %c0_i32 = arith.constant 0 : i32
    %c0_i32_0 = arith.constant 0 : i32
    %c0_i32_1 = arith.constant 0 : i32
    return %c0_i32, %c0_i32_0 : i32, i32
  }
  func.func @transform_4(%arg0: i32) -> (i32, i32) {
    %c0_i32 = arith.constant 0 : i32
    %c0_i32_0 = arith.constant 0 : i32
    %c0_i32_1 = arith.constant 0 : i32
    return %c0_i32, %c0_i32_0 : i32, i32
  }
  func.func @transform_5(%arg0: i32) -> (i32, i32) {
    %c0_i32 = arith.constant 0 : i32
    %c0_i32_0 = arith.constant 0 : i32
    %c0_i32_1 = arith.constant 0 : i32
    return %c0_i32, %c0_i32_0 : i32, i32
  }
  func.func @transform_6(%arg0: i32) -> (i32, i32) {
    %c0_i32 = arith.constant 0 : i32
    %c0_i32_0 = arith.constant 0 : i32
    %c0_i32_1 = arith.constant 0 : i32
    return %c0_i32, %c0_i32_0 : i32, i32
  }
  func.func @transform_7(%arg0: i32) -> (i32, i32) {
    %c0_i32 = arith.constant 0 : i32
    %c0_i32_0 = arith.constant 0 : i32
    %c0_i32_1 = arith.constant 0 : i32
    return %c0_i32, %c0_i32_0 : i32, i32
  }
  func.func @transform_8(%arg0: i32) -> (i32, i32) {
    %c0_i32 = arith.constant 0 : i32
    %c0_i32_0 = arith.constant 0 : i32
    %c0_i32_1 = arith.constant 0 : i32
    return %c0_i32, %c0_i32_0 : i32, i32
  }
  func.func @transform_9(%arg0: i32) -> (i32, i32) {
    %c0_i32 = arith.constant 0 : i32
    %c0_i32_0 = arith.constant 0 : i32
    %c0_i32_1 = arith.constant 0 : i32
    return %c0_i32, %c0_i32_0 : i32, i32
  }
  func.func @transform_10(%arg0: i32) -> (i32, i32) {
    %c0_i32 = arith.constant 0 : i32
    %c0_i32_0 = arith.constant 0 : i32
    %c0_i32_1 = arith.constant 0 : i32
    return %c0_i32, %c0_i32_0 : i32, i32
  }
  func.func @transform_11(%arg0: i32) -> (i32, i32) {
    %c0_i32 = arith.constant 0 : i32
    %c0_i32_0 = arith.constant 0 : i32
    %c0_i32_1 = arith.constant 0 : i32
    return %c0_i32, %c0_i32_0 : i32, i32
  }
  func.func @transform_12(%arg0: i32) -> (i32, i32) {
    %c0_i32 = arith.constant 0 : i32
    %c0_i32_0 = arith.constant 0 : i32
    %c0_i32_1 = arith.constant 0 : i32
    return %c0_i32, %c0_i32_0 : i32, i32
  }
  func.func @transform_13(%arg0: i32) -> (i32, i32) {
    %c0_i32 = arith.constant 0 : i32
    %c0_i32_0 = arith.constant 0 : i32
    return %arg0, %c0_i32 : i32, i32
  }
  func.func @transform_14(%arg0: i32) -> (i32, i32) {
    %c0_i32 = arith.constant 0 : i32
    %c0_i32_0 = arith.constant 0 : i32
    return %arg0, %c0_i32 : i32, i32
  }
}

</mosaic_0001>

<llo_original>
// kernel: logic_vae_forward.1
$region0: #{logic_vae_forward.1}
  #allocation0 [shape = 'u32[]', space=smem, size = 0x4, offset = 0x4, fixed_abs, tag = 'smem constant byte address 0x4 - core index']
  #allocation1 [shape = 'u32[144,128]{1,0:T(1,128)}', space=vmem, size = 0x12000, scoped, tag = 'internal scratch']
  %s0 = inlined_call_operand.vmem [shape: bf16[16,784], index: 0, kind: input, shape index: {}]
  %s1 = inlined_call_operand.vmem [shape: bf16[784,256], index: 1, kind: input, shape index: {}]
  %s2 = inlined_call_operand.vmem [shape: f32[1,256], index: 2, kind: input, shape index: {}]
  %s3 = inlined_call_operand.vmem [shape: bf16[256,256], index: 3, kind: input, shape index: {}]
  %s4 = inlined_call_operand.vmem [shape: f32[1,256], index: 4, kind: input, shape index: {}]
  %s5 = inlined_call_operand.vmem [shape: bf16[256,128], index: 5, kind: input, shape index: {}]
  %s6 = inlined_call_operand.vmem [shape: f32[1,128], index: 6, kind: input, shape index: {}]
  %s7 = inlined_call_operand.vmem [shape: bf16[128,256], index: 7, kind: input, shape index: {}]
  %s8 = inlined_call_operand.vmem [shape: f32[1,256], index: 8, kind: input, shape index: {}]
  %s9 = inlined_call_operand.vmem [shape: bf16[256,256], index: 9, kind: input, shape index: {}]
  %s10 = inlined_call_operand.vmem [shape: f32[1,256], index: 10, kind: input, shape index: {}]
  %s11 = inlined_call_operand.vmem [shape: bf16[256,784], index: 11, kind: input, shape index: {}]
  %s12 = inlined_call_operand.vmem [shape: f32[1,784], index: 12, kind: input, shape index: {}]
  %s13 = inlined_call_operand.hbm [shape: bf16[16,784], index: 13, kind: output, shape index: {0}]
  %s14 = inlined_call_operand.hbm [shape: bf16[16,128], index: 14, kind: output, shape index: {1}]
  %15 = xla_tuple %s13, %s14
  %s16 = sld [smem:[#allocation0]]
  $region70: #{logic_vae_forward.1} parent=0
    _
  %s18 = ssub.s32 1, %s16
  %s19 = scalar_select 0, %s18, %s16
  $region1: #{logic_vae_forward.1} parent=0
    #allocation2 [shape = 'u8[28672]{0}', space=vmem, size = 0x7000, scoped, tag = 'output window, operand 0, single buffered']
    #allocation3 [shape = 's32[1]{0}', space=sflag, size = 0x4, scoped, tag = 'scoped memory for logic_vae_forward.1']
    #allocation4 [shape = 'u8[4096]{0}', space=vmem, size = 0x1000, scoped, tag = 'output window, operand 1, single buffered']
    #allocation5 [shape = 's32[1]{0}', space=sflag, size = 0x4, scoped, tag = 'scoped memory for logic_vae_forward.1']
    %20 = vsyncpa [#allocation3], 0
    %21 = vsyncpa [#allocation5], 0
    // Predicated region
    $region2: #{logic_vae_forward.1} parent=1 // pred_check
      _
    $region3: #{logic_vae_forward.1} parent=1 // pred_check_branch
      %23 = sbr.rel (0) target = $region5
    $region4: #{logic_vae_forward.1} parent=1 // pred_region
      _
    $region5: #{logic_vae_forward.1} parent=1 // pred_fallthru
      _
    // Predicated region
    $region6: #{logic_vae_forward.1} parent=1 // pred_check
      _
    $region7: #{logic_vae_forward.1} parent=1 // pred_check_branch
      %25 = sbr.rel (0) target = $region9
    $region8: #{logic_vae_forward.1} parent=1 // pred_region
      _
    $region9: #{logic_vae_forward.1} parent=1 // pred_fallthru
      _
    // Predicated region
    $region10: #{logic_vae_forward.1} parent=1 // pred_check
      _
    $region11: #{logic_vae_forward.1} parent=1 // pred_check_branch
      %27 = sbr.rel (0) target = $region13
    $region12: #{logic_vae_forward.1} parent=1 // pred_region
      _
    $region13: #{logic_vae_forward.1} parent=1 // pred_fallthru
      _
    // Predicated region
    $region14: #{logic_vae_forward.1} parent=1 // pred_check
      _
    $region15: #{logic_vae_forward.1} parent=1 // pred_check_branch
      %29 = sbr.rel (0) target = $region17
    $region16: #{logic_vae_forward.1} parent=1 // pred_region
      _
    $region17: #{logic_vae_forward.1} parent=1 // pred_fallthru
      _
    // Predicated region
    $region18: #{logic_vae_forward.1} parent=1 // pred_check
      _
    $region19: #{logic_vae_forward.1} parent=1 // pred_check_branch
      %31 = sbr.rel (0) target = $region21
    $region20: #{logic_vae_forward.1} parent=1 // pred_region
      _
    $region21: #{logic_vae_forward.1} parent=1 // pred_fallthru
      _
    // Predicated region
    $region22: #{logic_vae_forward.1} parent=1 // pred_check
      _
    $region23: #{logic_vae_forward.1} parent=1 // pred_check_branch
      %33 = sbr.rel (0) target = $region25
    $region24: #{logic_vae_forward.1} parent=1 // pred_region
      _
    $region25: #{logic_vae_forward.1} parent=1 // pred_fallthru
      _
    // Predicated region
    $region26: #{logic_vae_forward.1} parent=1 // pred_check
      _
    $region27: #{logic_vae_forward.1} parent=1 // pred_check_branch
      %35 = sbr.rel (0) target = $region29
    $region28: #{logic_vae_forward.1} parent=1 // pred_region
      _
    $region29: #{logic_vae_forward.1} parent=1 // pred_fallthru
      _
    // Predicated region
    $region30: #{logic_vae_forward.1} parent=1 // pred_check
      _
    $region31: #{logic_vae_forward.1} parent=1 // pred_check_branch
      %37 = sbr.rel (0) target = $region33
    $region32: #{logic_vae_forward.1} parent=1 // pred_region
      _
    $region33: #{logic_vae_forward.1} parent=1 // pred_fallthru
      _
    // Predicated region
    $region34: #{logic_vae_forward.1} parent=1 // pred_check
      _
    $region35: #{logic_vae_forward.1} parent=1 // pred_check_branch
      %39 = sbr.rel (0) target = $region37
    $region36: #{logic_vae_forward.1} parent=1 // pred_region
      _
    $region37: #{logic_vae_forward.1} parent=1 // pred_fallthru
      _
    // Predicated region
    $region38: #{logic_vae_forward.1} parent=1 // pred_check
      _
    $region39: #{logic_vae_forward.1} parent=1 // pred_check_branch
      %41 = sbr.rel (0) target = $region41
    $region40: #{logic_vae_forward.1} parent=1 // pred_region
      _
    $region41: #{logic_vae_forward.1} parent=1 // pred_fallthru
      _
    // Predicated region
    $region42: #{logic_vae_forward.1} parent=1 // pred_check
      _
    $region43: #{logic_vae_forward.1} parent=1 // pred_check_branch
      %43 = sbr.rel (0) target = $region45
    $region44: #{logic_vae_forward.1} parent=1 // pred_region
      _
    $region45: #{logic_vae_forward.1} parent=1 // pred_fallthru
      _
    // Predicated region
    $region46: #{logic_vae_forward.1} parent=1 // pred_check
      _
    $region47: #{logic_vae_forward.1} parent=1 // pred_check_branch
      %45 = sbr.rel (0) target = $region49
    $region48: #{logic_vae_forward.1} parent=1 // pred_region
      _
    $region49: #{logic_vae_forward.1} parent=1 // pred_fallthru
      _
    // Predicated region
    $region50: #{logic_vae_forward.1} parent=1 // pred_check
      _
    $region51: #{logic_vae_forward.1} parent=1 // pred_check_branch
      %47 = sbr.rel (0) target = $region53
    $region52: #{logic_vae_forward.1} parent=1 // pred_region
      _
    $region53: #{logic_vae_forward.1} parent=1 // pred_fallthru
      _
    %v49 = vld [vmem:[%s0] sm:$0xff]
    %v50 = vld [vmem:[%s0 + $0x8] sm:$0xff]
    %v51 = vld [vmem:[%s0 + $0x10] sm:$0xff]
    %v52 = vld [vmem:[%s0 + $0x18] sm:$0xf]
    %v53 = vld [vmem:[%s0 + $0x1c] sm:$0xff]
    %v54 = vld [vmem:[%s0 + $0x24] sm:$0xff]
    %v55 = vld [vmem:[%s0 + $0x2c] sm:$0xff]
    %v56 = vld [vmem:[%s0 + $0x34] sm:$0xf]
    %v57 = vld [vmem:[%s1] sm:$0xff]
    %v58 = vld [vmem:[%s1 + $0x8] sm:$0xff]
    %v59 = vld [vmem:[%s1 + $0x10] sm:$0xff]
    %v60 = vld [vmem:[%s1 + $0x18] sm:$0xff]
    %v61 = vld [vmem:[%s1 + $0x20] sm:$0xff]
    %v62 = vld [vmem:[%s1 + $0x28] sm:$0xff]
    %v63 = vld [vmem:[%s1 + $0x30] sm:$0xff]
    %v64 = vld [vmem:[%s1 + $0x38] sm:$0xff]
    %v65 = vld [vmem:[%s1 + $0x40] sm:$0xff]
    %v66 = vld [vmem:[%s1 + $0x48] sm:$0xff]
    %v67 = vld [vmem:[%s1 + $0x50] sm:$0xff]
    %v68 = vld [vmem:[%s1 + $0x58] sm:$0xff]
    %v69 = vld [vmem:[%s1 + $0x60] sm:$0xff]
    %v70 = vld [vmem:[%s1 + $0x68] sm:$0xff]
    %v71 = vld [vmem:[%s1 + $0x70] sm:$0xff]
    %v72 = vld [vmem:[%s1 + $0x78] sm:$0xff]
    %v73 = vld [vmem:[%s1 + $0x80] sm:$0xff]
    %v74 = vld [vmem:[%s1 + $0x88] sm:$0xff]
    %v75 = vld [vmem:[%s1 + $0x90] sm:$0xff]
    %v76 = vld [vmem:[%s1 + $0x98] sm:$0xff]
    %v77 = vld [vmem:[%s1 + $0xa0] sm:$0xff]
    %v78 = vld [vmem:[%s1 + $0xa8] sm:$0xff]
    %v79 = vld [vmem:[%s1 + $0xb0] sm:$0xff]
    %v80 = vld [vmem:[%s1 + $0xb8] sm:$0xff]
    %v81 = vld [vmem:[%s1 + $0xc0] sm:$0xff]
    %v82 = vld [vmem:[%s1 + $0xc8] sm:$0xff]
    %v83 = vld [vmem:[%s1 + $0xd0] sm:$0xff]
    %v84 = vld [vmem:[%s1 + $0xd8] sm:$0xff]
    %v85 = vld [vmem:[%s1 + $0xe0] sm:$0xff]
    %v86 = vld [vmem:[%s1 + $0xe8] sm:$0xff]
    %v87 = vld [vmem:[%s1 + $0xf0] sm:$0xff]
    %v88 = vld [vmem:[%s1 + $0xf8] sm:$0xff]
    %v89 = vld [vmem:[%s1 + $0x100] sm:$0xff]
    %v90 = vld [vmem:[%s1 + $0x108] sm:$0xff]
    %v91 = vld [vmem:[%s1 + $0x110] sm:$0xff]
    %v92 = vld [vmem:[%s1 + $0x118] sm:$0xff]
    %v93 = vld [vmem:[%s1 + $0x120] sm:$0xff]
    %v94 = vld [vmem:[%s1 + $0x128] sm:$0xff]
    %v95 = vld [vmem:[%s1 + $0x130] sm:$0xff]
    %v96 = vld [vmem:[%s1 + $0x138] sm:$0xff]
    %v97 = vld [vmem:[%s1 + $0x140] sm:$0xff]
    %v98 = vld [vmem:[%s1 + $0x148] sm:$0xff]
    %v99 = vld [vmem:[%s1 + $0x150] sm:$0xff]
    %v100 = vld [vmem:[%s1 + $0x158] sm:$0xff]
    %v101 = vld [vmem:[%s1 + $0x160] sm:$0xff]
    %v102 = vld [vmem:[%s1 + $0x168] sm:$0xff]
    %v103 = vld [vmem:[%s1 + $0x170] sm:$0xff]
    %v104 = vld [vmem:[%s1 + $0x178] sm:$0xff]
    %v105 = vld [vmem:[%s1 + $0x180] sm:$0xff]
    %v106 = vld [vmem:[%s1 + $0x188] sm:$0xff]
    %v107 = vld [vmem:[%s1 + $0x190] sm:$0xff]
    %v108 = vld [vmem:[%s1 + $0x198] sm:$0xff]
    %v109 = vld [vmem:[%s1 + $0x1a0] sm:$0xff]
    %v110 = vld [vmem:[%s1 + $0x1a8] sm:$0xff]
    %v111 = vld [vmem:[%s1 + $0x1b0] sm:$0xff]
    %v112 = vld [vmem:[%s1 + $0x1b8] sm:$0xff]
    %v113 = vld [vmem:[%s1 + $0x1c0] sm:$0xff]
    %v114 = vld [vmem:[%s1 + $0x1c8] sm:$0xff]
    %v115 = vld [vmem:[%s1 + $0x1d0] sm:$0xff]
    %v116 = vld [vmem:[%s1 + $0x1d8] sm:$0xff]
    %v117 = vld [vmem:[%s1 + $0x1e0] sm:$0xff]
    %v118 = vld [vmem:[%s1 + $0x1e8] sm:$0xff]
    %v119 = vld [vmem:[%s1 + $0x1f0] sm:$0xff]
    %v120 = vld [vmem:[%s1 + $0x1f8] sm:$0xff]
    %v121 = vld [vmem:[%s1 + $0x200] sm:$0xff]
    %v122 = vld [vmem:[%s1 + $0x208] sm:$0xff]
    %v123 = vld [vmem:[%s1 + $0x210] sm:$0xff]
    %v124 = vld [vmem:[%s1 + $0x218] sm:$0xff]
    %v125 = vld [vmem:[%s1 + $0x220] sm:$0xff]
    %v126 = vld [vmem:[%s1 + $0x228] sm:$0xff]
    %v127 = vld [vmem:[%s1 + $0x230] sm:$0xff]
    %v128 = vld [vmem:[%s1 + $0x238] sm:$0xff]
    %v129 = vld [vmem:[%s1 + $0x240] sm:$0xff]
    %v130 = vld [vmem:[%s1 + $0x248] sm:$0xff]
    %v131 = vld [vmem:[%s1 + $0x250] sm:$0xff]
    %v132 = vld [vmem:[%s1 + $0x258] sm:$0xff]
    %v133 = vld [vmem:[%s1 + $0x260] sm:$0xff]
    %v134 = vld [vmem:[%s1 + $0x268] sm:$0xff]
    %v135 = vld [vmem:[%s1 + $0x270] sm:$0xff]
    %v136 = vld [vmem:[%s1 + $0x278] sm:$0xff]
    %v137 = vld [vmem:[%s1 + $0x280] sm:$0xff]
    %v138 = vld [vmem:[%s1 + $0x288] sm:$0xff]
    %v139 = vld [vmem:[%s1 + $0x290] sm:$0xff]
    %v140 = vld [vmem:[%s1 + $0x298] sm:$0xff]
    %v141 = vld [vmem:[%s1 + $0x2a0] sm:$0xff]
    %v142 = vld [vmem:[%s1 + $0x2a8] sm:$0xff]
    %v143 = vld [vmem:[%s1 + $0x2b0] sm:$0xff]
    %v144 = vld [vmem:[%s1 + $0x2b8] sm:$0xff]
    %v145 = vld [vmem:[%s1 + $0x2c0] sm:$0xff]
    %v146 = vld [vmem:[%s1 + $0x2c8] sm:$0xff]
    %v147 = vld [vmem:[%s1 + $0x2d0] sm:$0xff]
    %v148 = vld [vmem:[%s1 + $0x2d8] sm:$0xff]
    %v149 = vld [vmem:[%s1 + $0x2e0] sm:$0xff]
    %v150 = vld [vmem:[%s1 + $0x2e8] sm:$0xff]
    %v151 = vld [vmem:[%s1 + $0x2f0] sm:$0xff]
    %v152 = vld [vmem:[%s1 + $0x2f8] sm:$0xff]
    %v153 = vld [vmem:[%s1 + $0x300] sm:$0xff]
    %v154 = vld [vmem:[%s1 + $0x308] sm:$0xff]
    %v155 = vld [vmem:[%s2] sm:$0x3]
    %v157 = vlaneseq
    %v158 = vshrl.u32 %v157, 7
    %v159 = vsub.s32 0, %v158
    %v160 = vrot.slane %v155, %v159
    %v161 = vlaneseq
    %v162 = vshrl.u32 %v161, 7
    %v163 = vsub.s32 1, %v162
    %v164 = vrot.slane %v155, %v163
    %v175 = vunpack.c.l.b16 %v49
    %v176 = vunpack.c.h.b16 %v49
    %v177 = vunpack.c.l.b16 %v50
    %v178 = vunpack.c.h.b16 %v50
    %v179 = vunpack.c.l.b16 %v51
    %v180 = vunpack.c.h.b16 %v51
    %v181 = vunpack.c.l.b16 %v52
    %v182 = vunpack.c.l.b16 %v53
    %v183 = vunpack.c.h.b16 %v53
    %v184 = vunpack.c.l.b16 %v54
    %v185 = vunpack.c.h.b16 %v54
    %v186 = vunpack.c.l.b16 %v55
    %v187 = vunpack.c.h.b16 %v55
    %v188 = vunpack.c.l.b16 %v56
    %v189 = vpack.c.b16 %v182, %v175
    %v190 = vpack.c.b16 %v183, %v176
    %v191 = vpack.c.b16 %v184, %v177
    %v192 = vpack.c.b16 %v185, %v178
    %v193 = vpack.c.b16 %v186, %v179
    %v194 = vpack.c.b16 %v187, %v180
    %v195 = vpack.c.b16 %v188, %v181
    %v300 = vunpack.c.l.b16 %v57
    %v301 = vunpack.c.h.b16 %v57
    %v302 = vunpack.c.l.b16 %v58
    %v303 = vunpack.c.h.b16 %v58
    %v304 = vunpack.c.l.b16 %v59
    %v305 = vunpack.c.h.b16 %v59
    %v306 = vunpack.c.l.b16 %v60
    %v307 = vunpack.c.h.b16 %v60
    %v308 = vunpack.c.l.b16 %v61
    %v309 = vunpack.c.h.b16 %v61
    %v310 = vunpack.c.l.b16 %v62
    %v311 = vunpack.c.h.b16 %v62
    %v312 = vunpack.c.l.b16 %v63
    %v313 = vunpack.c.h.b16 %v63
    %v314 = vunpack.c.l.b16 %v64
    %v315 = vunpack.c.h.b16 %v64
    %v316 = vunpack.c.l.b16 %v65
    %v317 = vunpack.c.h.b16 %v65
    %v318 = vunpack.c.l.b16 %v66
    %v319 = vunpack.c.h.b16 %v66
    %v320 = vunpack.c.l.b16 %v67
    %v321 = vunpack.c.h.b16 %v67
    %v322 = vunpack.c.l.b16 %v68
    %v323 = vunpack.c.h.b16 %v68
    %v324 = vunpack.c.l.b16 %v69
    %v325 = vunpack.c.h.b16 %v69
    %v326 = vunpack.c.l.b16 %v70
    %v327 = vunpack.c.h.b16 %v70
    %v328 = vunpack.c.l.b16 %v71
    %v329 = vunpack.c.h.b16 %v71
    %v330 = vunpack.c.l.b16 %v72
    %v331 = vunpack.c.h.b16 %v72
    %v332 = vunpack.c.l.b16 %v73
    %v333 = vunpack.c.h.b16 %v73
    %v334 = vunpack.c.l.b16 %v74
    %v335 = vunpack.c.h.b16 %v74
    %v336 = vunpack.c.l.b16 %v75
    %v337 = vunpack.c.h.b16 %v75
    %v338 = vunpack.c.l.b16 %v76
    %v339 = vunpack.c.h.b16 %v76
    %v340 = vunpack.c.l.b16 %v77
    %v341 = vunpack.c.h.b16 %v77
    %v342 = vunpack.c.l.b16 %v78
    %v343 = vunpack.c.h.b16 %v78
    %v344 = vunpack.c.l.b16 %v79
    %v345 = vunpack.c.h.b16 %v79
    %v346 = vunpack.c.l.b16 %v80
    %v347 = vunpack.c.h.b16 %v80
    %v348 = vunpack.c.l.b16 %v81
    %v349 = vunpack.c.h.b16 %v81
    %v350 = vunpack.c.l.b16 %v82
    %v351 = vunpack.c.h.b16 %v82
    %v352 = vunpack.c.l.b16 %v83
    %v353 = vunpack.c.h.b16 %v83
    %v354 = vunpack.c.l.b16 %v84
    %v355 = vunpack.c.h.b16 %v84
    %v356 = vunpack.c.l.b16 %v85
    %v357 = vunpack.c.h.b16 %v85
    %v358 = vunpack.c.l.b16 %v86
    %v359 = vunpack.c.h.b16 %v86
    %v360 = vunpack.c.l.b16 %v87
    %v361 = vunpack.c.h.b16 %v87
    %v362 = vunpack.c.l.b16 %v88
    %v363 = vunpack.c.h.b16 %v88
    %v364 = vunpack.c.l.b16 %v89
    %v365 = vunpack.c.h.b16 %v89
    %v366 = vunpack.c.l.b16 %v90
    %v367 = vunpack.c.h.b16 %v90
    %v368 = vunpack.c.l.b16 %v91
    %v369 = vunpack.c.h.b16 %v91
    %v370 = vunpack.c.l.b16 %v92
    %v371 = vunpack.c.h.b16 %v92
    %v372 = vunpack.c.l.b16 %v93
    %v373 = vunpack.c.h.b16 %v93
    %v374 = vunpack.c.l.b16 %v94
    %v375 = vunpack.c.h.b16 %v94
    %v376 = vunpack.c.l.b16 %v95
    %v377 = vunpack.c.h.b16 %v95
    %v378 = vunpack.c.l.b16 %v96
    %v379 = vunpack.c.h.b16 %v96
    %v380 = vunpack.c.l.b16 %v97
    %v381 = vunpack.c.h.b16 %v97
    %v382 = vunpack.c.l.b16 %v98
    %v383 = vunpack.c.h.b16 %v98
    %v384 = vunpack.c.l.b16 %v99
    %v385 = vunpack.c.h.b16 %v99
    %v386 = vunpack.c.l.b16 %v100
    %v387 = vunpack.c.h.b16 %v100
    %v388 = vunpack.c.l.b16 %v101
    %v389 = vunpack.c.h.b16 %v101
    %v390 = vunpack.c.l.b16 %v102
    %v391 = vunpack.c.h.b16 %v102
    %v392 = vunpack.c.l.b16 %v103
    %v393 = vunpack.c.h.b16 %v103
    %v394 = vunpack.c.l.b16 %v104
    %v395 = vunpack.c.h.b16 %v104
    %v396 = vunpack.c.l.b16 %v105
    %v397 = vunpack.c.h.b16 %v105
    %v398 = vunpack.c.l.b16 %v106
    %v399 = vunpack.c.h.b16 %v106
    %v400 = vunpack.c.l.b16 %v107
    %v401 = vunpack.c.h.b16 %v107
    %v402 = vunpack.c.l.b16 %v108
    %v403 = vunpack.c.h.b16 %v108
    %v404 = vunpack.c.l.b16 %v109
    %v405 = vunpack.c.h.b16 %v109
    %v406 = vunpack.c.l.b16 %v110
    %v407 = vunpack.c.h.b16 %v110
    %v408 = vunpack.c.l.b16 %v111
    %v409 = vunpack.c.h.b16 %v111
    %v410 = vunpack.c.l.b16 %v112
    %v411 = vunpack.c.h.b16 %v112
    %v412 = vunpack.c.l.b16 %v113
    %v413 = vunpack.c.h.b16 %v113
    %v414 = vunpack.c.l.b16 %v114
    %v415 = vunpack.c.h.b16 %v114
    %v416 = vunpack.c.l.b16 %v115
    %v417 = vunpack.c.h.b16 %v115
    %v418 = vunpack.c.l.b16 %v116
    %v419 = vunpack.c.h.b16 %v116
    %v420 = vunpack.c.l.b16 %v117
    %v421 = vunpack.c.h.b16 %v117
    %v422 = vunpack.c.l.b16 %v118
    %v423 = vunpack.c.h.b16 %v118
    %v424 = vunpack.c.l.b16 %v119
    %v425 = vunpack.c.h.b16 %v119
    %v426 = vunpack.c.l.b16 %v120
    %v427 = vunpack.c.h.b16 %v120
    %v428 = vunpack.c.l.b16 %v121
    %v429 = vunpack.c.h.b16 %v121
    %v430 = vunpack.c.l.b16 %v122
    %v431 = vunpack.c.h.b16 %v122
    %v432 = vunpack.c.l.b16 %v123
    %v433 = vunpack.c.h.b16 %v123
    %v434 = vunpack.c.l.b16 %v124
    %v435 = vunpack.c.h.b16 %v124
    %v436 = vunpack.c.l.b16 %v125
    %v437 = vunpack.c.h.b16 %v125
    %v438 = vunpack.c.l.b16 %v126
    %v439 = vunpack.c.h.b16 %v126
    %v440 = vunpack.c.l.b16 %v127
    %v441 = vunpack.c.h.b16 %v127
    %v442 = vunpack.c.l.b16 %v128
    %v443 = vunpack.c.h.b16 %v128
    %v444 = vunpack.c.l.b16 %v129
    %v445 = vunpack.c.h.b16 %v129
    %v446 = vunpack.c.l.b16 %v130
    %v447 = vunpack.c.h.b16 %v130
    %v448 = vunpack.c.l.b16 %v131
    %v449 = vunpack.c.h.b16 %v131
    %v450 = vunpack.c.l.b16 %v132
    %v451 = vunpack.c.h.b16 %v132
    %v452 = vunpack.c.l.b16 %v133
    %v453 = vunpack.c.h.b16 %v133
    %v454 = vunpack.c.l.b16 %v134
    %v455 = vunpack.c.h.b16 %v134
    %v456 = vunpack.c.l.b16 %v135
    %v457 = vunpack.c.h.b16 %v135
    %v458 = vunpack.c.l.b16 %v136
    %v459 = vunpack.c.h.b16 %v136
    %v460 = vunpack.c.l.b16 %v137
    %v461 = vunpack.c.h.b16 %v137
    %v462 = vunpack.c.l.b16 %v138
    %v463 = vunpack.c.h.b16 %v138
    %v464 = vunpack.c.l.b16 %v139
    %v465 = vunpack.c.h.b16 %v139
    %v466 = vunpack.c.l.b16 %v140
    %v467 = vunpack.c.h.b16 %v140
    %v468 = vunpack.c.l.b16 %v141
    %v469 = vunpack.c.h.b16 %v141
    %v470 = vunpack.c.l.b16 %v142
    %v471 = vunpack.c.h.b16 %v142
    %v472 = vunpack.c.l.b16 %v143
    %v473 = vunpack.c.h.b16 %v143
    %v474 = vunpack.c.l.b16 %v144
    %v475 = vunpack.c.h.b16 %v144
    %v476 = vunpack.c.l.b16 %v145
    %v477 = vunpack.c.h.b16 %v145
    %v478 = vunpack.c.l.b16 %v146
    %v479 = vunpack.c.h.b16 %v146
    %v480 = vunpack.c.l.b16 %v147
    %v481 = vunpack.c.h.b16 %v147
    %v482 = vunpack.c.l.b16 %v148
    %v483 = vunpack.c.h.b16 %v148
    %v484 = vunpack.c.l.b16 %v149
    %v485 = vunpack.c.h.b16 %v149
    %v486 = vunpack.c.l.b16 %v150
    %v487 = vunpack.c.h.b16 %v150
    %v488 = vunpack.c.l.b16 %v151
    %v489 = vunpack.c.h.b16 %v151
    %v490 = vunpack.c.l.b16 %v152
    %v491 = vunpack.c.h.b16 %v152
    %v492 = vunpack.c.l.b16 %v153
    %v493 = vunpack.c.h.b16 %v153
    %v494 = vunpack.c.l.b16 %v154
    %v495 = vunpack.c.h.b16 %v154
    %v496 = vpack.c.b16 %v302, %v300
    %v497 = vpack.c.b16 %v303, %v301
    %v498 = vpack.c.b16 %v306, %v304
    %v499 = vpack.c.b16 %v307, %v305
    %v500 = vpack.c.b16 %v310, %v308
    %v501 = vpack.c.b16 %v311, %v309
    %v502 = vpack.c.b16 %v314, %v312
    %v503 = vpack.c.b16 %v315, %v313
    %v504 = vpack.c.b16 %v318, %v316
    %v505 = vpack.c.b16 %v319, %v317
    %v506 = vpack.c.b16 %v322, %v320
    %v507 = vpack.c.b16 %v323, %v321
    %v508 = vpack.c.b16 %v326, %v324
    %v509 = vpack.c.b16 %v327, %v325
    %v510 = vpack.c.b16 %v330, %v328
    %v511 = vpack.c.b16 %v331, %v329
    %v512 = vpack.c.b16 %v334, %v332
    %v513 = vpack.c.b16 %v335, %v333
    %v514 = vpack.c.b16 %v338, %v336
    %v515 = vpack.c.b16 %v339, %v337
    %v516 = vpack.c.b16 %v342, %v340
    %v517 = vpack.c.b16 %v343, %v341
    %v518 = vpack.c.b16 %v346, %v344
    %v519 = vpack.c.b16 %v347, %v345
    %v520 = vpack.c.b16 %v350, %v348
    %v521 = vpack.c.b16 %v351, %v349
    %v522 = vpack.c.b16 %v354, %v352
    %v523 = vpack.c.b16 %v355, %v353
    %v524 = vpack.c.b16 %v358, %v356
    %v525 = vpack.c.b16 %v359, %v357
    %v526 = vpack.c.b16 %v362, %v360
    %v527 = vpack.c.b16 %v363, %v361
    %v528 = vpack.c.b16 %v366, %v364
    %v529 = vpack.c.b16 %v367, %v365
    %v530 = vpack.c.b16 %v370, %v368
    %v531 = vpack.c.b16 %v371, %v369
    %v532 = vpack.c.b16 %v374, %v372
    %v533 = vpack.c.b16 %v375, %v373
    %v534 = vpack.c.b16 %v378, %v376
    %v535 = vpack.c.b16 %v379, %v377
    %v536 = vpack.c.b16 %v382, %v380
    %v537 = vpack.c.b16 %v383, %v381
    %v538 = vpack.c.b16 %v386, %v384
    %v539 = vpack.c.b16 %v387, %v385
    %v540 = vpack.c.b16 %v390, %v388
    %v541 = vpack.c.b16 %v391, %v389
    %v542 = vpack.c.b16 %v394, %v392
    %v543 = vpack.c.b16 %v395, %v393
    %v544 = vpack.c.b16 %v398, %v396
    %v545 = vpack.c.b16 %v399, %v397
    %v546 = vpack.c.b16 %v402, %v400
    %v547 = vpack.c.b16 %v403, %v401
    %v548 = vpack.c.b16 %v406, %v404
    %v549 = vpack.c.b16 %v407, %v405
    %v550 = vpack.c.b16 %v410, %v408
    %v551 = vpack.c.b16 %v411, %v409
    %v552 = vpack.c.b16 %v414, %v412
    %v553 = vpack.c.b16 %v415, %v413
    %v554 = vpack.c.b16 %v418, %v416
    %v555 = vpack.c.b16 %v419, %v417
    %v556 = vpack.c.b16 %v422, %v420
    %v557 = vpack.c.b16 %v423, %v421
    %v558 = vpack.c.b16 %v426, %v424
    %v559 = vpack.c.b16 %v427, %v425
    %v560 = vpack.c.b16 %v430, %v428
    %v561 = vpack.c.b16 %v431, %v429
    %v562 = vpack.c.b16 %v434, %v432
    %v563 = vpack.c.b16 %v435, %v433
    %v564 = vpack.c.b16 %v438, %v436
    %v565 = vpack.c.b16 %v439, %v437
    %v566 = vpack.c.b16 %v442, %v440
    %v567 = vpack.c.b16 %v443, %v441
    %v568 = vpack.c.b16 %v446, %v444
    %v569 = vpack.c.b16 %v447, %v445
    %v570 = vpack.c.b16 %v450, %v448
    %v571 = vpack.c.b16 %v451, %v449
    %v572 = vpack.c.b16 %v454, %v452
    %v573 = vpack.c.b16 %v455, %v453
    %v574 = vpack.c.b16 %v458, %v456
    %v575 = vpack.c.b16 %v459, %v457
    %v576 = vpack.c.b16 %v462, %v460
    %v577 = vpack.c.b16 %v463, %v461
    %v578 = vpack.c.b16 %v466, %v464
    %v579 = vpack.c.b16 %v467, %v465
    %v580 = vpack.c.b16 %v470, %v468
    %v581 = vpack.c.b16 %v471, %v469
    %v582 = vpack.c.b16 %v474, %v472
    %v583 = vpack.c.b16 %v475, %v473
    %v584 = vpack.c.b16 %v478, %v476
    %v585 = vpack.c.b16 %v479, %v477
    %v586 = vpack.c.b16 %v482, %v480
    %v587 = vpack.c.b16 %v483, %v481
    %v588 = vpack.c.b16 %v486, %v484
    %v589 = vpack.c.b16 %v487, %v485
    %v590 = vpack.c.b16 %v490, %v488
    %v591 = vpack.c.b16 %v491, %v489
    %v592 = vpack.c.b16 %v494, %v492
    %v593 = vpack.c.b16 %v495, %v493
    %vm692 = vcmask 130048
    %v694 = vsel %vm692, %v195, 0
    %696 = vmatprep.subr.bf16.mxu0 %v511
    %697 = vmatpush1.bf16.msra.mxu0 %v510
    %698 = vmatprep.subr.bf16.mxu0 %v509
    %699 = vmatpush1.bf16.msra.mxu0 %v508
    %700 = vmatprep.subr.bf16.mxu0 %v507
    %701 = vmatpush1.bf16.msra.mxu0 %v506
    %702 = vmatprep.subr.bf16.mxu0 %v505
    %703 = vmatpush1.bf16.msra.mxu0 %v504
    %704 = vmatprep.subr.bf16.mxu0 %v503
    %705 = vmatpush1.bf16.msra.mxu0 %v502
    %706 = vmatprep.subr.bf16.mxu0 %v501
    %707 = vmatpush1.bf16.msra.mxu0 %v500
    %708 = vmatprep.subr.bf16.mxu0 %v499
    %709 = vmatpush1.bf16.msra.mxu0 %v498
    %710 = vmatprep.subr.bf16.mxu0 %v497
    %711 = vmatpush1.bf16.msra.mxu0 %v496
    %712 = vmatprep.subr.bf16.mxu0 %v527
    %713 = vmatpush2.bf16.msra.mxu0 %v526
    %714 = vmatprep.subr.bf16.mxu0 %v525
    %715 = vmatpush2.bf16.msra.mxu0 %v524
    %716 = vmatprep.subr.bf16.mxu0 %v523
    %717 = vmatpush2.bf16.msra.mxu0 %v522
    %718 = vmatprep.subr.bf16.mxu0 %v521
    %719 = vmatpush2.bf16.msra.mxu0 %v520
    %720 = vmatprep.subr.bf16.mxu0 %v519
    %721 = vmatpush2.bf16.msra.mxu0 %v518
    %722 = vmatprep.subr.bf16.mxu0 %v517
    %723 = vmatpush2.bf16.msra.mxu0 %v516
    %724 = vmatprep.subr.bf16.mxu0 %v515
    %725 = vmatpush2.bf16.msra.mxu0 %v514
    %726 = vmatprep.subr.bf16.mxu0 %v513
    %727 = vmatpush2.bf16.msra.mxu0 %v512
    %728 = vmatprep.mubr.bf16.mxu0 %v190
    %729 = vmatmul.mubr.bf16.gmra.mxu0 %v189
    %v730 = vpop.f32.mrf.mxu0
    %v731 = vadd.f32 %v160, %v730
    %v732 = vpop.f32.mrf.mxu0
    %v733 = vadd.f32 %v164, %v732
    %v734 = vpop.f32.mrf.mxu0
    %v735 = vadd.f32 %v160, %v734
    %v736 = vpop.f32.mrf.mxu0
    %v737 = vadd.f32 %v164, %v736
    %738 = vdwg.mxu0
    %739 = vmatprep.subr.bf16.mxu0 %v543
    %740 = vmatpush1.bf16.msra.mxu0 %v542
    %741 = vmatprep.subr.bf16.mxu0 %v541
    %742 = vmatpush1.bf16.msra.mxu0 %v540
    %743 = vmatprep.subr.bf16.mxu0 %v539
    %744 = vmatpush1.bf16.msra.mxu0 %v538
    %745 = vmatprep.subr.bf16.mxu0 %v537
    %746 = vmatpush1.bf16.msra.mxu0 %v536
    %747 = vmatprep.subr.bf16.mxu0 %v535
    %748 = vmatpush1.bf16.msra.mxu0 %v534
    %749 = vmatprep.subr.bf16.mxu0 %v533
    %750 = vmatpush1.bf16.msra.mxu0 %v532
    %751 = vmatprep.subr.bf16.mxu0 %v531
    %752 = vmatpush1.bf16.msra.mxu0 %v530
    %753 = vmatprep.subr.bf16.mxu0 %v529
    %754 = vmatpush1.bf16.msra.mxu0 %v528
    %755 = vmatprep.subr.bf16.mxu0 %v559
    %756 = vmatpush2.bf16.msra.mxu0 %v558
    %757 = vmatprep.subr.bf16.mxu0 %v557
    %758 = vmatpush2.bf16.msra.mxu0 %v556
    %759 = vmatprep.subr.bf16.mxu0 %v555
    %760 = vmatpush2.bf16.msra.mxu0 %v554
    %761 = vmatprep.subr.bf16.mxu0 %v553
    %762 = vmatpush2.bf16.msra.mxu0 %v552
    %763 = vmatprep.subr.bf16.mxu0 %v551
    %764 = vmatpush2.bf16.msra.mxu0 %v550
    %765 = vmatprep.subr.bf16.mxu0 %v549
    %766 = vmatpush2.bf16.msra.mxu0 %v548
    %767 = vmatprep.subr.bf16.mxu0 %v547
    %768 = vmatpush2.bf16.msra.mxu0 %v546
    %769 = vmatprep.subr.bf16.mxu0 %v545
    %770 = vmatpush2.bf16.msra.mxu0 %v544
    %771 = vmatprep.mubr.bf16.mxu0 %v192
    %772 = vmatmul.mubr.bf16.gmra.mxu0 %v191
    %v773 = vpop.f32.mrf.mxu0
    %v774 = vadd.f32 %v731, %v773
    %v775 = vpop.f32.mrf.mxu0
    %v776 = vadd.f32 %v733, %v775
    %v777 = vpop.f32.mrf.mxu0
    %v778 = vadd.f32 %v735, %v777
    %v779 = vpop.f32.mrf.mxu0
    %v780 = vadd.f32 %v737, %v779
    %781 = vdwg.mxu0
    %782 = vmatprep.subr.bf16.mxu0 %v575
    %783 = vmatpush1.bf16.msra.mxu0 %v574
    %784 = vmatprep.subr.bf16.mxu0 %v573
    %785 = vmatpush1.bf16.msra.mxu0 %v572
    %786 = vmatprep.subr.bf16.mxu0 %v571
    %787 = vmatpush1.bf16.msra.mxu0 %v570
    %788 = vmatprep.subr.bf16.mxu0 %v569
    %789 = vmatpush1.bf16.msra.mxu0 %v568
    %790 = vmatprep.subr.bf16.mxu0 %v567
    %791 = vmatpush1.bf16.msra.mxu0 %v566
    %792 = vmatprep.subr.bf16.mxu0 %v565
    %793 = vmatpush1.bf16.msra.mxu0 %v564
    %794 = vmatprep.subr.bf16.mxu0 %v563
    %795 = vmatpush1.bf16.msra.mxu0 %v562
    %796 = vmatprep.subr.bf16.mxu0 %v561
    %797 = vmatpush1.bf16.msra.mxu0 %v560
    %798 = vmatprep.subr.bf16.mxu0 %v591
    %799 = vmatpush2.bf16.msra.mxu0 %v590
    %800 = vmatprep.subr.bf16.mxu0 %v589
    %801 = vmatpush2.bf16.msra.mxu0 %v588
    %802 = vmatprep.subr.bf16.mxu0 %v587
    %803 = vmatpush2.bf16.msra.mxu0 %v586
    %804 = vmatprep.subr.bf16.mxu0 %v585
    %805 = vmatpush2.bf16.msra.mxu0 %v584
    %806 = vmatprep.subr.bf16.mxu0 %v583
    %807 = vmatpush2.bf16.msra.mxu0 %v582
    %808 = vmatprep.subr.bf16.mxu0 %v581
    %809 = vmatpush2.bf16.msra.mxu0 %v580
    %810 = vmatprep.subr.bf16.mxu0 %v579
    %811 = vmatpush2.bf16.msra.mxu0 %v578
    %812 = vmatprep.subr.bf16.mxu0 %v577
    %813 = vmatpush2.bf16.msra.mxu0 %v576
    %814 = vmatprep.mubr.bf16.mxu0 %v194
    %815 = vmatmul.mubr.bf16.gmra.mxu0 %v193
    %v816 = vpop.f32.mrf.mxu0
    %v817 = vadd.f32 %v774, %v816
    %v818 = vpop.f32.mrf.mxu0
    %v819 = vadd.f32 %v776, %v818
    %v820 = vpop.f32.mrf.mxu0
    %v821 = vadd.f32 %v778, %v820
    %v822 = vpop.f32.mrf.mxu0
    %v823 = vadd.f32 %v780, %v822
    %824 = vdwg.mxu0
    %825 = vmatprep.subr.bf16.mxu0 0
    %826 = vmatpush1.bf16.msra.mxu0 0
    %827 = vmatprep.subr.bf16.mxu0 0
    %828 = vmatpush1.bf16.msra.mxu0 0
    %829 = vmatprep.subr.bf16.mxu0 0
    %830 = vmatpush1.bf16.msra.mxu0 0
    %831 = vmatprep.subr.bf16.mxu0 0
    %832 = vmatpush1.bf16.msra.mxu0 0
    %833 = vmatprep.subr.bf16.mxu0 0
    %834 = vmatpush1.bf16.msra.mxu0 0
    %835 = vmatprep.subr.bf16.mxu0 0
    %836 = vmatpush1.bf16.msra.mxu0 0
    %837 = vmatprep.subr.bf16.mxu0 0
    %838 = vmatpush1.bf16.msra.mxu0 0
    %839 = vmatprep.subr.bf16.mxu0 %v593
    %840 = vmatpush1.bf16.msra.mxu0 %v592
    %841 = vmatprep.subr.bf16.mxu0 0
    %842 = vmatpush2.bf16.msra.mxu0 0
    %843 = vmatprep.subr.bf16.mxu0 0
    %844 = vmatpush2.bf16.msra.mxu0 0
    %845 = vmatprep.subr.bf16.mxu0 0
    %846 = vmatpush2.bf16.msra.mxu0 0
    %847 = vmatprep.subr.bf16.mxu0 0
    %848 = vmatpush2.bf16.msra.mxu0 0
    %849 = vmatprep.subr.bf16.mxu0 0
    %850 = vmatpush2.bf16.msra.mxu0 0
    %851 = vmatprep.subr.bf16.mxu0 0
    %852 = vmatpush2.bf16.msra.mxu0 0
    %853 = vmatprep.subr.bf16.mxu0 0
    %854 = vmatpush2.bf16.msra.mxu0 0
    %855 = vmatprep.subr.bf16.mxu0 0
    %856 = vmatpush2.bf16.msra.mxu0 0
    %857 = vmatprep.mubr.bf16.mxu0 0
    %858 = vmatmul.mubr.bf16.gmra.mxu0 %v694
    %v859 = vpop.f32.mrf.mxu0
    %v860 = vadd.f32 %v817, %v859
    %v861 = vpop.f32.mrf.mxu0
    %v862 = vadd.f32 %v819, %v861
    %v863 = vpop.f32.mrf.mxu0
    %v864 = vadd.f32 %v821, %v863
    %v865 = vpop.f32.mrf.mxu0
    %v866 = vadd.f32 %v823, %v865
    %867 = vdwg.mxu0
    %v868 = vmax.f32 %v860, 0.0
    %v869 = vmax.f32 %v862, 0.0
    %v870 = vmax.f32 %v864, 0.0
    %v871 = vmax.f32 %v866, 0.0
    %v872 = vpack.c.bf16 %v870, %v868
    %v873 = vpack.c.bf16 %v871, %v869
    %v874 = vld [vmem:[%s3] sm:$0xff]
    %v875 = vld [vmem:[%s3 + $0x8] sm:$0xff]
    %v876 = vld [vmem:[%s3 + $0x10] sm:$0xff]
    %v877 = vld [vmem:[%s3 + $0x18] sm:$0xff]
    %v878 = vld [vmem:[%s3 + $0x20] sm:$0xff]
    %v879 = vld [vmem:[%s3 + $0x28] sm:$0xff]
    %v880 = vld [vmem:[%s3 + $0x30] sm:$0xff]
    %v881 = vld [vmem:[%s3 + $0x38] sm:$0xff]
    %v882 = vld [vmem:[%s3 + $0x40] sm:$0xff]
    %v883 = vld [vmem:[%s3 + $0x48] sm:$0xff]
    %v884 = vld [vmem:[%s3 + $0x50] sm:$0xff]
    %v885 = vld [vmem:[%s3 + $0x58] sm:$0xff]
    %v886 = vld [vmem:[%s3 + $0x60] sm:$0xff]
    %v887 = vld [vmem:[%s3 + $0x68] sm:$0xff]
    %v888 = vld [vmem:[%s3 + $0x70] sm:$0xff]
    %v889 = vld [vmem:[%s3 + $0x78] sm:$0xff]
    %v890 = vld [vmem:[%s3 + $0x80] sm:$0xff]
    %v891 = vld [vmem:[%s3 + $0x88] sm:$0xff]
    %v892 = vld [vmem:[%s3 + $0x90] sm:$0xff]
    %v893 = vld [vmem:[%s3 + $0x98] sm:$0xff]
    %v894 = vld [vmem:[%s3 + $0xa0] sm:$0xff]
    %v895 = vld [vmem:[%s3 + $0xa8] sm:$0xff]
    %v896 = vld [vmem:[%s3 + $0xb0] sm:$0xff]
    %v897 = vld [vmem:[%s3 + $0xb8] sm:$0xff]
    %v898 = vld [vmem:[%s3 + $0xc0] sm:$0xff]
    %v899 = vld [vmem:[%s3 + $0xc8] sm:$0xff]
    %v900 = vld [vmem:[%s3 + $0xd0] sm:$0xff]
    %v901 = vld [vmem:[%s3 + $0xd8] sm:$0xff]
    %v902 = vld [vmem:[%s3 + $0xe0] sm:$0xff]
    %v903 = vld [vmem:[%s3 + $0xe8] sm:$0xff]
    %v904 = vld [vmem:[%s3 + $0xf0] sm:$0xff]
    %v905 = vld [vmem:[%s3 + $0xf8] sm:$0xff]
    %v906 = vld [vmem:[%s4] sm:$0x3]
    %v908 = vlaneseq
    %v909 = vshrl.u32 %v908, 7
    %v910 = vsub.s32 0, %v909
    %v911 = vrot.slane %v906, %v910
    %v912 = vlaneseq
    %v913 = vshrl.u32 %v912, 7
    %v914 = vsub.s32 1, %v913
    %v915 = vrot.slane %v906, %v914
    %v950 = vunpack.c.l.b16 %v874
    %v951 = vunpack.c.h.b16 %v874
    %v952 = vunpack.c.l.b16 %v875
    %v953 = vunpack.c.h.b16 %v875
    %v954 = vunpack.c.l.b16 %v876
    %v955 = vunpack.c.h.b16 %v876
    %v956 = vunpack.c.l.b16 %v877
    %v957 = vunpack.c.h.b16 %v877
    %v958 = vunpack.c.l.b16 %v878
    %v959 = vunpack.c.h.b16 %v878
    %v960 = vunpack.c.l.b16 %v879
    %v961 = vunpack.c.h.b16 %v879
    %v962 = vunpack.c.l.b16 %v880
    %v963 = vunpack.c.h.b16 %v880
    %v964 = vunpack.c.l.b16 %v881
    %v965 = vunpack.c.h.b16 %v881
    %v966 = vunpack.c.l.b16 %v882
    %v967 = vunpack.c.h.b16 %v882
    %v968 = vunpack.c.l.b16 %v883
    %v969 = vunpack.c.h.b16 %v883
    %v970 = vunpack.c.l.b16 %v884
    %v971 = vunpack.c.h.b16 %v884
    %v972 = vunpack.c.l.b16 %v885
    %v973 = vunpack.c.h.b16 %v885
    %v974 = vunpack.c.l.b16 %v886
    %v975 = vunpack.c.h.b16 %v886
    %v976 = vunpack.c.l.b16 %v887
    %v977 = vunpack.c.h.b16 %v887
    %v978 = vunpack.c.l.b16 %v888
    %v979 = vunpack.c.h.b16 %v888
    %v980 = vunpack.c.l.b16 %v889
    %v981 = vunpack.c.h.b16 %v889
    %v982 = vunpack.c.l.b16 %v890
    %v983 = vunpack.c.h.b16 %v890
    %v984 = vunpack.c.l.b16 %v891
    %v985 = vunpack.c.h.b16 %v891
    %v986 = vunpack.c.l.b16 %v892
    %v987 = vunpack.c.h.b16 %v892
    %v988 = vunpack.c.l.b16 %v893
    %v989 = vunpack.c.h.b16 %v893
    %v990 = vunpack.c.l.b16 %v894
    %v991 = vunpack.c.h.b16 %v894
    %v992 = vunpack.c.l.b16 %v895
    %v993 = vunpack.c.h.b16 %v895
    %v994 = vunpack.c.l.b16 %v896
    %v995 = vunpack.c.h.b16 %v896
    %v996 = vunpack.c.l.b16 %v897
    %v997 = vunpack.c.h.b16 %v897
    %v998 = vunpack.c.l.b16 %v898
    %v999 = vunpack.c.h.b16 %v898
    %v1000 = vunpack.c.l.b16 %v899
    %v1001 = vunpack.c.h.b16 %v899
    %v1002 = vunpack.c.l.b16 %v900
    %v1003 = vunpack.c.h.b16 %v900
    %v1004 = vunpack.c.l.b16 %v901
    %v1005 = vunpack.c.h.b16 %v901
    %v1006 = vunpack.c.l.b16 %v902
    %v1007 = vunpack.c.h.b16 %v902
    %v1008 = vunpack.c.l.b16 %v903
    %v1009 = vunpack.c.h.b16 %v903
    %v1010 = vunpack.c.l.b16 %v904
    %v1011 = vunpack.c.h.b16 %v904
    %v1012 = vunpack.c.l.b16 %v905
    %v1013 = vunpack.c.h.b16 %v905
    %v1014 = vpack.c.b16 %v952, %v950
    %v1015 = vpack.c.b16 %v953, %v951
    %v1016 = vpack.c.b16 %v956, %v954
    %v1017 = vpack.c.b16 %v957, %v955
    %v1018 = vpack.c.b16 %v960, %v958
    %v1019 = vpack.c.b16 %v961, %v959
    %v1020 = vpack.c.b16 %v964, %v962
    %v1021 = vpack.c.b16 %v965, %v963
    %v1022 = vpack.c.b16 %v968, %v966
    %v1023 = vpack.c.b16 %v969, %v967
    %v1024 = vpack.c.b16 %v972, %v970
    %v1025 = vpack.c.b16 %v973, %v971
    %v1026 = vpack.c.b16 %v976, %v974
    %v1027 = vpack.c.b16 %v977, %v975
    %v1028 = vpack.c.b16 %v980, %v978
    %v1029 = vpack.c.b16 %v981, %v979
    %v1030 = vpack.c.b16 %v984, %v982
    %v1031 = vpack.c.b16 %v985, %v983
    %v1032 = vpack.c.b16 %v988, %v986
    %v1033 = vpack.c.b16 %v989, %v987
    %v1034 = vpack.c.b16 %v992, %v990
    %v1035 = vpack.c.b16 %v993, %v991
    %v1036 = vpack.c.b16 %v996, %v994
    %v1037 = vpack.c.b16 %v997, %v995
    %v1038 = vpack.c.b16 %v1000, %v998
    %v1039 = vpack.c.b16 %v1001, %v999
    %v1040 = vpack.c.b16 %v1004, %v1002
    %v1041 = vpack.c.b16 %v1005, %v1003
    %v1042 = vpack.c.b16 %v1008, %v1006
    %v1043 = vpack.c.b16 %v1009, %v1007
    %v1044 = vpack.c.b16 %v1012, %v1010
    %v1045 = vpack.c.b16 %v1013, %v1011
    %1078 = vmatprep.subr.bf16.mxu0 %v1029
    %1079 = vmatpush1.bf16.msra.mxu0 %v1028
    %1080 = vmatprep.subr.bf16.mxu0 %v1027
    %1081 = vmatpush1.bf16.msra.mxu0 %v1026
    %1082 = vmatprep.subr.bf16.mxu0 %v1025
    %1083 = vmatpush1.bf16.msra.mxu0 %v1024
    %1084 = vmatprep.subr.bf16.mxu0 %v1023
    %1085 = vmatpush1.bf16.msra.mxu0 %v1022
    %1086 = vmatprep.subr.bf16.mxu0 %v1021
    %1087 = vmatpush1.bf16.msra.mxu0 %v1020
    %1088 = vmatprep.subr.bf16.mxu0 %v1019
    %1089 = vmatpush1.bf16.msra.mxu0 %v1018
    %1090 = vmatprep.subr.bf16.mxu0 %v1017
    %1091 = vmatpush1.bf16.msra.mxu0 %v1016
    %1092 = vmatprep.subr.bf16.mxu0 %v1015
    %1093 = vmatpush1.bf16.msra.mxu0 %v1014
    %1094 = vmatprep.subr.bf16.mxu0 %v1045
    %1095 = vmatpush2.bf16.msra.mxu0 %v1044
    %1096 = vmatprep.subr.bf16.mxu0 %v1043
    %1097 = vmatpush2.bf16.msra.mxu0 %v1042
    %1098 = vmatprep.subr.bf16.mxu0 %v1041
    %1099 = vmatpush2.bf16.msra.mxu0 %v1040
    %1100 = vmatprep.subr.bf16.mxu0 %v1039
    %1101 = vmatpush2.bf16.msra.mxu0 %v1038
    %1102 = vmatprep.subr.bf16.mxu0 %v1037
    %1103 = vmatpush2.bf16.msra.mxu0 %v1036
    %1104 = vmatprep.subr.bf16.mxu0 %v1035
    %1105 = vmatpush2.bf16.msra.mxu0 %v1034
    %1106 = vmatprep.subr.bf16.mxu0 %v1033
    %1107 = vmatpush2.bf16.msra.mxu0 %v1032
    %1108 = vmatprep.subr.bf16.mxu0 %v1031
    %1109 = vmatpush2.bf16.msra.mxu0 %v1030
    %1110 = vmatprep.mubr.bf16.mxu0 %v873
    %1111 = vmatmul.mubr.bf16.gmra.mxu0 %v872
    %v1112 = vpop.f32.mrf.mxu0
    %v1113 = vadd.f32 %v911, %v1112
    %v1114 = vpop.f32.mrf.mxu0
    %v1115 = vadd.f32 %v915, %v1114
    %v1116 = vpop.f32.mrf.mxu0
    %v1117 = vadd.f32 %v911, %v1116
    %v1118 = vpop.f32.mrf.mxu0
    %v1119 = vadd.f32 %v915, %v1118
    %1120 = vdwg.mxu0
    %v1121 = vmax.f32 %v1113, 0.0
    %v1122 = vmax.f32 %v1115, 0.0
    %v1123 = vmax.f32 %v1117, 0.0
    %v1124 = vmax.f32 %v1119, 0.0
    %v1125 = vpack.c.bf16 %v1123, %v1121
    %v1126 = vpack.c.bf16 %v1124, %v1122
    %v1127 = vld [vmem:[%s5] sm:$0xf]
    %v1128 = vld [vmem:[%s5 + $0x4] sm:$0xf]
    %v1129 = vld [vmem:[%s5 + $0x8] sm:$0xf]
    %v1130 = vld [vmem:[%s5 + $0xc] sm:$0xf]
    %v1131 = vld [vmem:[%s5 + $0x10] sm:$0xf]
    %v1132 = vld [vmem:[%s5 + $0x14] sm:$0xf]
    %v1133 = vld [vmem:[%s5 + $0x18] sm:$0xf]
    %v1134 = vld [vmem:[%s5 + $0x1c] sm:$0xf]
    %v1135 = vld [vmem:[%s5 + $0x20] sm:$0xf]
    %v1136 = vld [vmem:[%s5 + $0x24] sm:$0xf]
    %v1137 = vld [vmem:[%s5 + $0x28] sm:$0xf]
    %v1138 = vld [vmem:[%s5 + $0x2c] sm:$0xf]
    %v1139 = vld [vmem:[%s5 + $0x30] sm:$0xf]
    %v1140 = vld [vmem:[%s5 + $0x34] sm:$0xf]
    %v1141 = vld [vmem:[%s5 + $0x38] sm:$0xf]
    %v1142 = vld [vmem:[%s5 + $0x3c] sm:$0xf]
    %v1143 = vld [vmem:[%s5 + $0x40] sm:$0xf]
    %v1144 = vld [vmem:[%s5 + $0x44] sm:$0xf]
    %v1145 = vld [vmem:[%s5 + $0x48] sm:$0xf]
    %v1146 = vld [vmem:[%s5 + $0x4c] sm:$0xf]
    %v1147 = vld [vmem:[%s5 + $0x50] sm:$0xf]
    %v1148 = vld [vmem:[%s5 + $0x54] sm:$0xf]
    %v1149 = vld [vmem:[%s5 + $0x58] sm:$0xf]
    %v1150 = vld [vmem:[%s5 + $0x5c] sm:$0xf]
    %v1151 = vld [vmem:[%s5 + $0x60] sm:$0xf]
    %v1152 = vld [vmem:[%s5 + $0x64] sm:$0xf]
    %v1153 = vld [vmem:[%s5 + $0x68] sm:$0xf]
    %v1154 = vld [vmem:[%s5 + $0x6c] sm:$0xf]
    %v1155 = vld [vmem:[%s5 + $0x70] sm:$0xf]
    %v1156 = vld [vmem:[%s5 + $0x74] sm:$0xf]
    %v1157 = vld [vmem:[%s5 + $0x78] sm:$0xf]
    %v1158 = vld [vmem:[%s5 + $0x7c] sm:$0xf]
    %v1159 = vld [vmem:[%s6] sm:$0x1]
    %v1161 = vlaneseq
    %v1162 = vshrl.u32 %v1161, 7
    %v1163 = vsub.s32 0, %v1162
    %v1164 = vrot.slane %v1159, %v1163
    %v1198 = vunpack.c.l.b16 %v1127
    %v1199 = vunpack.c.l.b16 %v1128
    %v1200 = vunpack.c.l.b16 %v1129
    %v1201 = vunpack.c.l.b16 %v1130
    %v1202 = vunpack.c.l.b16 %v1131
    %v1203 = vunpack.c.l.b16 %v1132
    %v1204 = vunpack.c.l.b16 %v1133
    %v1205 = vunpack.c.l.b16 %v1134
    %v1206 = vunpack.c.l.b16 %v1135
    %v1207 = vunpack.c.l.b16 %v1136
    %v1208 = vunpack.c.l.b16 %v1137
    %v1209 = vunpack.c.l.b16 %v1138
    %v1210 = vunpack.c.l.b16 %v1139
    %v1211 = vunpack.c.l.b16 %v1140
    %v1212 = vunpack.c.l.b16 %v1141
    %v1213 = vunpack.c.l.b16 %v1142
    %v1214 = vunpack.c.l.b16 %v1143
    %v1215 = vunpack.c.l.b16 %v1144
    %v1216 = vunpack.c.l.b16 %v1145
    %v1217 = vunpack.c.l.b16 %v1146
    %v1218 = vunpack.c.l.b16 %v1147
    %v1219 = vunpack.c.l.b16 %v1148
    %v1220 = vunpack.c.l.b16 %v1149
    %v1221 = vunpack.c.l.b16 %v1150
    %v1222 = vunpack.c.l.b16 %v1151
    %v1223 = vunpack.c.l.b16 %v1152
    %v1224 = vunpack.c.l.b16 %v1153
    %v1225 = vunpack.c.l.b16 %v1154
    %v1226 = vunpack.c.l.b16 %v1155
    %v1227 = vunpack.c.l.b16 %v1156
    %v1228 = vunpack.c.l.b16 %v1157
    %v1229 = vunpack.c.l.b16 %v1158
    %v1230 = vpack.c.b16 %v1199, %v1198
    %v1231 = vpack.c.b16 %v1201, %v1200
    %v1232 = vpack.c.b16 %v1203, %v1202
    %v1233 = vpack.c.b16 %v1205, %v1204
    %v1234 = vpack.c.b16 %v1207, %v1206
    %v1235 = vpack.c.b16 %v1209, %v1208
    %v1236 = vpack.c.b16 %v1211, %v1210
    %v1237 = vpack.c.b16 %v1213, %v1212
    %v1238 = vpack.c.b16 %v1215, %v1214
    %v1239 = vpack.c.b16 %v1217, %v1216
    %v1240 = vpack.c.b16 %v1219, %v1218
    %v1241 = vpack.c.b16 %v1221, %v1220
    %v1242 = vpack.c.b16 %v1223, %v1222
    %v1243 = vpack.c.b16 %v1225, %v1224
    %v1244 = vpack.c.b16 %v1227, %v1226
    %v1245 = vpack.c.b16 %v1229, %v1228
    %1262 = vmatprep.subr.bf16.mxu0 0
    %1263 = vmatpush1.bf16.msra.mxu0 %v1237
    %1264 = vmatprep.subr.bf16.mxu0 0
    %1265 = vmatpush1.bf16.msra.mxu0 %v1236
    %1266 = vmatprep.subr.bf16.mxu0 0
    %1267 = vmatpush1.bf16.msra.mxu0 %v1235
    %1268 = vmatprep.subr.bf16.mxu0 0
    %1269 = vmatpush1.bf16.msra.mxu0 %v1234
    %1270 = vmatprep.subr.bf16.mxu0 0
    %1271 = vmatpush1.bf16.msra.mxu0 %v1233
    %1272 = vmatprep.subr.bf16.mxu0 0
    %1273 = vmatpush1.bf16.msra.mxu0 %v1232
    %1274 = vmatprep.subr.bf16.mxu0 0
    %1275 = vmatpush1.bf16.msra.mxu0 %v1231
    %1276 = vmatprep.subr.bf16.mxu0 0
    %1277 = vmatpush1.bf16.msra.mxu0 %v1230
    %1278 = vmatprep.subr.bf16.mxu0 0
    %1279 = vmatpush2.bf16.msra.mxu0 %v1245
    %1280 = vmatprep.subr.bf16.mxu0 0
    %1281 = vmatpush2.bf16.msra.mxu0 %v1244
    %1282 = vmatprep.subr.bf16.mxu0 0
    %1283 = vmatpush2.bf16.msra.mxu0 %v1243
    %1284 = vmatprep.subr.bf16.mxu0 0
    %1285 = vmatpush2.bf16.msra.mxu0 %v1242
    %1286 = vmatprep.subr.bf16.mxu0 0
    %1287 = vmatpush2.bf16.msra.mxu0 %v1241
    %1288 = vmatprep.subr.bf16.mxu0 0
    %1289 = vmatpush2.bf16.msra.mxu0 %v1240
    %1290 = vmatprep.subr.bf16.mxu0 0
    %1291 = vmatpush2.bf16.msra.mxu0 %v1239
    %1292 = vmatprep.subr.bf16.mxu0 0
    %1293 = vmatpush2.bf16.msra.mxu0 %v1238
    %1294 = vmatprep.mubr.bf16.mxu0 %v1126
    %1295 = vmatmul.mubr.bf16.gmra.mxu0 %v1125
    %v1296 = vpop.f32.mrf.mxu0
    %v1297 = vadd.f32 %v1164, %v1296
    %v1298 = vpop.f32.mrf.mxu0
    %v1299 = vpop.f32.mrf.mxu0
    %v1300 = vadd.f32 %v1164, %v1299
    %v1301 = vpop.f32.mrf.mxu0
    %1302 = vdwg.mxu0
    %v1303 = vpack.c.bf16 %v1300, %v1297
    %v1305 = vunpack.c.l.b16 %v1303
    %v1306 = vunpack.c.h.b16 %v1303
    %v1307 = vpack.c.b16 %v1305, %v1305
    %v1308 = vpack.c.b16 %v1306, %v1306
    %1311 = vst [vmem:[#allocation4] sm:$0xf] %v1307
    %1312 = vst [vmem:[#allocation4 + $0x4] sm:$0xf] %v1308
    %v1313 = vld [vmem:[%s7] sm:$0xff]
    %v1314 = vld [vmem:[%s7 + $0x8] sm:$0xff]
    %v1315 = vld [vmem:[%s7 + $0x10] sm:$0xff]
    %v1316 = vld [vmem:[%s7 + $0x18] sm:$0xff]
    %v1317 = vld [vmem:[%s7 + $0x20] sm:$0xff]
    %v1318 = vld [vmem:[%s7 + $0x28] sm:$0xff]
    %v1319 = vld [vmem:[%s7 + $0x30] sm:$0xff]
    %v1320 = vld [vmem:[%s7 + $0x38] sm:$0xff]
    %v1321 = vld [vmem:[%s7 + $0x40] sm:$0xff]
    %v1322 = vld [vmem:[%s7 + $0x48] sm:$0xff]
    %v1323 = vld [vmem:[%s7 + $0x50] sm:$0xff]
    %v1324 = vld [vmem:[%s7 + $0x58] sm:$0xff]
    %v1325 = vld [vmem:[%s7 + $0x60] sm:$0xff]
    %v1326 = vld [vmem:[%s7 + $0x68] sm:$0xff]
    %v1327 = vld [vmem:[%s7 + $0x70] sm:$0xff]
    %v1328 = vld [vmem:[%s7 + $0x78] sm:$0xff]
    %v1329 = vld [vmem:[%s8] sm:$0x3]
    %v1331 = vlaneseq
    %v1332 = vshrl.u32 %v1331, 7
    %v1333 = vsub.s32 0, %v1332
    %v1334 = vrot.slane %v1329, %v1333
    %v1335 = vlaneseq
    %v1336 = vshrl.u32 %v1335, 7
    %v1337 = vsub.s32 1, %v1336
    %v1338 = vrot.slane %v1329, %v1337
    %v1357 = vunpack.c.l.b16 %v1313
    %v1358 = vunpack.c.h.b16 %v1313
    %v1359 = vunpack.c.l.b16 %v1314
    %v1360 = vunpack.c.h.b16 %v1314
    %v1361 = vunpack.c.l.b16 %v1315
    %v1362 = vunpack.c.h.b16 %v1315
    %v1363 = vunpack.c.l.b16 %v1316
    %v1364 = vunpack.c.h.b16 %v1316
    %v1365 = vunpack.c.l.b16 %v1317
    %v1366 = vunpack.c.h.b16 %v1317
    %v1367 = vunpack.c.l.b16 %v1318
    %v1368 = vunpack.c.h.b16 %v1318
    %v1369 = vunpack.c.l.b16 %v1319
    %v1370 = vunpack.c.h.b16 %v1319
    %v1371 = vunpack.c.l.b16 %v1320
    %v1372 = vunpack.c.h.b16 %v1320
    %v1373 = vunpack.c.l.b16 %v1321
    %v1374 = vunpack.c.h.b16 %v1321
    %v1375 = vunpack.c.l.b16 %v1322
    %v1376 = vunpack.c.h.b16 %v1322
    %v1377 = vunpack.c.l.b16 %v1323
    %v1378 = vunpack.c.h.b16 %v1323
    %v1379 = vunpack.c.l.b16 %v1324
    %v1380 = vunpack.c.h.b16 %v1324
    %v1381 = vunpack.c.l.b16 %v1325
    %v1382 = vunpack.c.h.b16 %v1325
    %v1383 = vunpack.c.l.b16 %v1326
    %v1384 = vunpack.c.h.b16 %v1326
    %v1385 = vunpack.c.l.b16 %v1327
    %v1386 = vunpack.c.h.b16 %v1327
    %v1387 = vunpack.c.l.b16 %v1328
    %v1388 = vunpack.c.h.b16 %v1328
    %v1389 = vpack.c.b16 %v1359, %v1357
    %v1390 = vpack.c.b16 %v1360, %v1358
    %v1391 = vpack.c.b16 %v1363, %v1361
    %v1392 = vpack.c.b16 %v1364, %v1362
    %v1393 = vpack.c.b16 %v1367, %v1365
    %v1394 = vpack.c.b16 %v1368, %v1366
    %v1395 = vpack.c.b16 %v1371, %v1369
    %v1396 = vpack.c.b16 %v1372, %v1370
    %v1397 = vpack.c.b16 %v1375, %v1373
    %v1398 = vpack.c.b16 %v1376, %v1374
    %v1399 = vpack.c.b16 %v1379, %v1377
    %v1400 = vpack.c.b16 %v1380, %v1378
    %v1401 = vpack.c.b16 %v1383, %v1381
    %v1402 = vpack.c.b16 %v1384, %v1382
    %v1403 = vpack.c.b16 %v1387, %v1385
    %v1404 = vpack.c.b16 %v1388, %v1386
    %1421 = vmatprep.subr.bf16.mxu0 %v1404
    %1422 = vmatpush1.bf16.msra.mxu0 %v1403
    %1423 = vmatprep.subr.bf16.mxu0 %v1402
    %1424 = vmatpush1.bf16.msra.mxu0 %v1401
    %1425 = vmatprep.subr.bf16.mxu0 %v1400
    %1426 = vmatpush1.bf16.msra.mxu0 %v1399
    %1427 = vmatprep.subr.bf16.mxu0 %v1398
    %1428 = vmatpush1.bf16.msra.mxu0 %v1397
    %1429 = vmatprep.subr.bf16.mxu0 %v1396
    %1430 = vmatpush1.bf16.msra.mxu0 %v1395
    %1431 = vmatprep.subr.bf16.mxu0 %v1394
    %1432 = vmatpush1.bf16.msra.mxu0 %v1393
    %1433 = vmatprep.subr.bf16.mxu0 %v1392
    %1434 = vmatpush1.bf16.msra.mxu0 %v1391
    %1435 = vmatprep.subr.bf16.mxu0 %v1390
    %1436 = vmatpush1.bf16.msra.mxu0 %v1389
    %1437 = vmatprep.subr.bf16.mxu0 0
    %1438 = vmatpush2.bf16.msra.mxu0 0
    %1439 = vmatprep.subr.bf16.mxu0 0
    %1440 = vmatpush2.bf16.msra.mxu0 0
    %1441 = vmatprep.subr.bf16.mxu0 0
    %1442 = vmatpush2.bf16.msra.mxu0 0
    %1443 = vmatprep.subr.bf16.mxu0 0
    %1444 = vmatpush2.bf16.msra.mxu0 0
    %1445 = vmatprep.subr.bf16.mxu0 0
    %1446 = vmatpush2.bf16.msra.mxu0 0
    %1447 = vmatprep.subr.bf16.mxu0 0
    %1448 = vmatpush2.bf16.msra.mxu0 0
    %1449 = vmatprep.subr.bf16.mxu0 0
    %1450 = vmatpush2.bf16.msra.mxu0 0
    %1451 = vmatprep.subr.bf16.mxu0 0
    %1452 = vmatpush2.bf16.msra.mxu0 0
    %1453 = vmatprep.mubr.bf16.mxu0 0
    %1454 = vmatmul.mubr.bf16.gmra.mxu0 %v1303
    %v1455 = vpop.f32.mrf.mxu0
    %v1456 = vadd.f32 %v1334, %v1455
    %v1457 = vpop.f32.mrf.mxu0
    %v1458 = vadd.f32 %v1338, %v1457
    %v1459 = vpop.f32.mrf.mxu0
    %v1460 = vadd.f32 %v1334, %v1459
    %v1461 = vpop.f32.mrf.mxu0
    %v1462 = vadd.f32 %v1338, %v1461
    %1463 = vdwg.mxu0
    %v1464 = vmax.f32 %v1456, 0.0
    %v1465 = vmax.f32 %v1458, 0.0
    %v1466 = vmax.f32 %v1460, 0.0
    %v1467 = vmax.f32 %v1462, 0.0
    %v1468 = vpack.c.bf16 %v1466, %v1464
    %v1469 = vpack.c.bf16 %v1467, %v1465
    %v1470 = vld [vmem:[%s9] sm:$0xff]
    %v1471 = vld [vmem:[%s9 + $0x8] sm:$0xff]
    %v1472 = vld [vmem:[%s9 + $0x10] sm:$0xff]
    %v1473 = vld [vmem:[%s9 + $0x18] sm:$0xff]
    %v1474 = vld [vmem:[%s9 + $0x20] sm:$0xff]
    %v1475 = vld [vmem:[%s9 + $0x28] sm:$0xff]
    %v1476 = vld [vmem:[%s9 + $0x30] sm:$0xff]
    %v1477 = vld [vmem:[%s9 + $0x38] sm:$0xff]
    %v1478 = vld [vmem:[%s9 + $0x40] sm:$0xff]
    %v1479 = vld [vmem:[%s9 + $0x48] sm:$0xff]
    %v1480 = vld [vmem:[%s9 + $0x50] sm:$0xff]
    %v1481 = vld [vmem:[%s9 + $0x58] sm:$0xff]
    %v1482 = vld [vmem:[%s9 + $0x60] sm:$0xff]
    %v1483 = vld [vmem:[%s9 + $0x68] sm:$0xff]
    %v1484 = vld [vmem:[%s9 + $0x70] sm:$0xff]
    %v1485 = vld [vmem:[%s9 + $0x78] sm:$0xff]
    %v1486 = vld [vmem:[%s9 + $0x80] sm:$0xff]
    %v1487 = vld [vmem:[%s9 + $0x88] sm:$0xff]
    %v1488 = vld [vmem:[%s9 + $0x90] sm:$0xff]
    %v1489 = vld [vmem:[%s9 + $0x98] sm:$0xff]
    %v1490 = vld [vmem:[%s9 + $0xa0] sm:$0xff]
    %v1491 = vld [vmem:[%s9 + $0xa8] sm:$0xff]
    %v1492 = vld [vmem:[%s9 + $0xb0] sm:$0xff]
    %v1493 = vld [vmem:[%s9 + $0xb8] sm:$0xff]
    %v1494 = vld [vmem:[%s9 + $0xc0] sm:$0xff]
    %v1495 = vld [vmem:[%s9 + $0xc8] sm:$0xff]
    %v1496 = vld [vmem:[%s9 + $0xd0] sm:$0xff]
    %v1497 = vld [vmem:[%s9 + $0xd8] sm:$0xff]
    %v1498 = vld [vmem:[%s9 + $0xe0] sm:$0xff]
    %v1499 = vld [vmem:[%s9 + $0xe8] sm:$0xff]
    %v1500 = vld [vmem:[%s9 + $0xf0] sm:$0xff]
    %v1501 = vld [vmem:[%s9 + $0xf8] sm:$0xff]
    %v1502 = vld [vmem:[%s10] sm:$0x3]
    %v1504 = vlaneseq
    %v1505 = vshrl.u32 %v1504, 7
    %v1506 = vsub.s32 0, %v1505
    %v1507 = vrot.slane %v1502, %v1506
    %v1508 = vlaneseq
    %v1509 = vshrl.u32 %v1508, 7
    %v1510 = vsub.s32 1, %v1509
    %v1511 = vrot.slane %v1502, %v1510
    %v1546 = vunpack.c.l.b16 %v1470
    %v1547 = vunpack.c.h.b16 %v1470
    %v1548 = vunpack.c.l.b16 %v1471
    %v1549 = vunpack.c.h.b16 %v1471
    %v1550 = vunpack.c.l.b16 %v1472
    %v1551 = vunpack.c.h.b16 %v1472
    %v1552 = vunpack.c.l.b16 %v1473
    %v1553 = vunpack.c.h.b16 %v1473
    %v1554 = vunpack.c.l.b16 %v1474
    %v1555 = vunpack.c.h.b16 %v1474
    %v1556 = vunpack.c.l.b16 %v1475
    %v1557 = vunpack.c.h.b16 %v1475
    %v1558 = vunpack.c.l.b16 %v1476
    %v1559 = vunpack.c.h.b16 %v1476
    %v1560 = vunpack.c.l.b16 %v1477
    %v1561 = vunpack.c.h.b16 %v1477
    %v1562 = vunpack.c.l.b16 %v1478
    %v1563 = vunpack.c.h.b16 %v1478
    %v1564 = vunpack.c.l.b16 %v1479
    %v1565 = vunpack.c.h.b16 %v1479
    %v1566 = vunpack.c.l.b16 %v1480
    %v1567 = vunpack.c.h.b16 %v1480
    %v1568 = vunpack.c.l.b16 %v1481
    %v1569 = vunpack.c.h.b16 %v1481
    %v1570 = vunpack.c.l.b16 %v1482
    %v1571 = vunpack.c.h.b16 %v1482
    %v1572 = vunpack.c.l.b16 %v1483
    %v1573 = vunpack.c.h.b16 %v1483
    %v1574 = vunpack.c.l.b16 %v1484
    %v1575 = vunpack.c.h.b16 %v1484
    %v1576 = vunpack.c.l.b16 %v1485
    %v1577 = vunpack.c.h.b16 %v1485
    %v1578 = vunpack.c.l.b16 %v1486
    %v1579 = vunpack.c.h.b16 %v1486
    %v1580 = vunpack.c.l.b16 %v1487
    %v1581 = vunpack.c.h.b16 %v1487
    %v1582 = vunpack.c.l.b16 %v1488
    %v1583 = vunpack.c.h.b16 %v1488
    %v1584 = vunpack.c.l.b16 %v1489
    %v1585 = vunpack.c.h.b16 %v1489
    %v1586 = vunpack.c.l.b16 %v1490
    %v1587 = vunpack.c.h.b16 %v1490
    %v1588 = vunpack.c.l.b16 %v1491
    %v1589 = vunpack.c.h.b16 %v1491
    %v1590 = vunpack.c.l.b16 %v1492
    %v1591 = vunpack.c.h.b16 %v1492
    %v1592 = vunpack.c.l.b16 %v1493
    %v1593 = vunpack.c.h.b16 %v1493
    %v1594 = vunpack.c.l.b16 %v1494
    %v1595 = vunpack.c.h.b16 %v1494
    %v1596 = vunpack.c.l.b16 %v1495
    %v1597 = vunpack.c.h.b16 %v1495
    %v1598 = vunpack.c.l.b16 %v1496
    %v1599 = vunpack.c.h.b16 %v1496
    %v1600 = vunpack.c.l.b16 %v1497
    %v1601 = vunpack.c.h.b16 %v1497
    %v1602 = vunpack.c.l.b16 %v1498
    %v1603 = vunpack.c.h.b16 %v1498
    %v1604 = vunpack.c.l.b16 %v1499
    %v1605 = vunpack.c.h.b16 %v1499
    %v1606 = vunpack.c.l.b16 %v1500
    %v1607 = vunpack.c.h.b16 %v1500
    %v1608 = vunpack.c.l.b16 %v1501
    %v1609 = vunpack.c.h.b16 %v1501
    %v1610 = vpack.c.b16 %v1548, %v1546
    %v1611 = vpack.c.b16 %v1549, %v1547
    %v1612 = vpack.c.b16 %v1552, %v1550
    %v1613 = vpack.c.b16 %v1553, %v1551
    %v1614 = vpack.c.b16 %v1556, %v1554
    %v1615 = vpack.c.b16 %v1557, %v1555
    %v1616 = vpack.c.b16 %v1560, %v1558
    %v1617 = vpack.c.b16 %v1561, %v1559
    %v1618 = vpack.c.b16 %v1564, %v1562
    %v1619 = vpack.c.b16 %v1565, %v1563
    %v1620 = vpack.c.b16 %v1568, %v1566
    %v1621 = vpack.c.b16 %v1569, %v1567
    %v1622 = vpack.c.b16 %v1572, %v1570
    %v1623 = vpack.c.b16 %v1573, %v1571
    %v1624 = vpack.c.b16 %v1576, %v1574
    %v1625 = vpack.c.b16 %v1577, %v1575
    %v1626 = vpack.c.b16 %v1580, %v1578
    %v1627 = vpack.c.b16 %v1581, %v1579
    %v1628 = vpack.c.b16 %v1584, %v1582
    %v1629 = vpack.c.b16 %v1585, %v1583
    %v1630 = vpack.c.b16 %v1588, %v1586
    %v1631 = vpack.c.b16 %v1589, %v1587
    %v1632 = vpack.c.b16 %v1592, %v1590
    %v1633 = vpack.c.b16 %v1593, %v1591
    %v1634 = vpack.c.b16 %v1596, %v1594
    %v1635 = vpack.c.b16 %v1597, %v1595
    %v1636 = vpack.c.b16 %v1600, %v1598
    %v1637 = vpack.c.b16 %v1601, %v1599
    %v1638 = vpack.c.b16 %v1604, %v1602
    %v1639 = vpack.c.b16 %v1605, %v1603
    %v1640 = vpack.c.b16 %v1608, %v1606
    %v1641 = vpack.c.b16 %v1609, %v1607
    %1674 = vmatprep.subr.bf16.mxu0 %v1625
    %1675 = vmatpush1.bf16.msra.mxu0 %v1624
    %1676 = vmatprep.subr.bf16.mxu0 %v1623
    %1677 = vmatpush1.bf16.msra.mxu0 %v1622
    %1678 = vmatprep.subr.bf16.mxu0 %v1621
    %1679 = vmatpush1.bf16.msra.mxu0 %v1620
    %1680 = vmatprep.subr.bf16.mxu0 %v1619
    %1681 = vmatpush1.bf16.msra.mxu0 %v1618
    %1682 = vmatprep.subr.bf16.mxu0 %v1617
    %1683 = vmatpush1.bf16.msra.mxu0 %v1616
    %1684 = vmatprep.subr.bf16.mxu0 %v1615
    %1685 = vmatpush1.bf16.msra.mxu0 %v1614
    %1686 = vmatprep.subr.bf16.mxu0 %v1613
    %1687 = vmatpush1.bf16.msra.mxu0 %v1612
    %1688 = vmatprep.subr.bf16.mxu0 %v1611
    %1689 = vmatpush1.bf16.msra.mxu0 %v1610
    %1690 = vmatprep.subr.bf16.mxu0 %v1641
    %1691 = vmatpush2.bf16.msra.mxu0 %v1640
    %1692 = vmatprep.subr.bf16.mxu0 %v1639
    %1693 = vmatpush2.bf16.msra.mxu0 %v1638
    %1694 = vmatprep.subr.bf16.mxu0 %v1637
    %1695 = vmatpush2.bf16.msra.mxu0 %v1636
    %1696 = vmatprep.subr.bf16.mxu0 %v1635
    %1697 = vmatpush2.bf16.msra.mxu0 %v1634
    %1698 = vmatprep.subr.bf16.mxu0 %v1633
    %1699 = vmatpush2.bf16.msra.mxu0 %v1632
    %1700 = vmatprep.subr.bf16.mxu0 %v1631
    %1701 = vmatpush2.bf16.msra.mxu0 %v1630
    %1702 = vmatprep.subr.bf16.mxu0 %v1629
    %1703 = vmatpush2.bf16.msra.mxu0 %v1628
    %1704 = vmatprep.subr.bf16.mxu0 %v1627
    %1705 = vmatpush2.bf16.msra.mxu0 %v1626
    %1706 = vmatprep.mubr.bf16.mxu0 %v1469
    %1707 = vmatmul.mubr.bf16.gmra.mxu0 %v1468
    %v1708 = vpop.f32.mrf.mxu0
    %v1709 = vadd.f32 %v1507, %v1708
    %v1710 = vpop.f32.mrf.mxu0
    %v1711 = vadd.f32 %v1511, %v1710
    %v1712 = vpop.f32.mrf.mxu0
    %v1713 = vadd.f32 %v1507, %v1712
    %v1714 = vpop.f32.mrf.mxu0
    %v1715 = vadd.f32 %v1511, %v1714
    %1716 = vdwg.mxu0
    %v1717 = vmax.f32 %v1709, 0.0
    %v1718 = vmax.f32 %v1711, 0.0
    %v1719 = vmax.f32 %v1713, 0.0
    %v1720 = vmax.f32 %v1715, 0.0
    %v1721 = vpack.c.bf16 %v1719, %v1717
    %v1722 = vpack.c.bf16 %v1720, %v1718
    %v1723 = vld [vmem:[%s11] sm:$0xff]
    %v1724 = vld [vmem:[%s11 + $0x8] sm:$0xff]
    %v1725 = vld [vmem:[%s11 + $0x10] sm:$0xff]
    %v1726 = vld [vmem:[%s11 + $0x18] sm:$0xf]
    %v1727 = vld [vmem:[%s11 + $0x1c] sm:$0xff]
    %v1728 = vld [vmem:[%s11 + $0x24] sm:$0xff]
    %v1729 = vld [vmem:[%s11 + $0x2c] sm:$0xff]
    %v1730 = vld [vmem:[%s11 + $0x34] sm:$0xf]
    %v1731 = vld [vmem:[%s11 + $0x38] sm:$0xff]
    %v1732 = vld [vmem:[%s11 + $0x40] sm:$0xff]
    %v1733 = vld [vmem:[%s11 + $0x48] sm:$0xff]
    %v1734 = vld [vmem:[%s11 + $0x50] sm:$0xf]
    %v1735 = vld [vmem:[%s11 + $0x54] sm:$0xff]
    %v1736 = vld [vmem:[%s11 + $0x5c] sm:$0xff]
    %v1737 = vld [vmem:[%s11 + $0x64] sm:$0xff]
    %v1738 = vld [vmem:[%s11 + $0x6c] sm:$0xf]
    %v1739 = vld [vmem:[%s11 + $0x70] sm:$0xff]
    %v1740 = vld [vmem:[%s11 + $0x78] sm:$0xff]
    %v1741 = vld [vmem:[%s11 + $0x80] sm:$0xff]
    %v1742 = vld [vmem:[%s11 + $0x88] sm:$0xf]
    %v1743 = vld [vmem:[%s11 + $0x8c] sm:$0xff]
    %v1744 = vld [vmem:[%s11 + $0x94] sm:$0xff]
    %v1745 = vld [vmem:[%s11 + $0x9c] sm:$0xff]
    %v1746 = vld [vmem:[%s11 + $0xa4] sm:$0xf]
    %v1747 = vld [vmem:[%s11 + $0xa8] sm:$0xff]
    %v1748 = vld [vmem:[%s11 + $0xb0] sm:$0xff]
    %v1749 = vld [vmem:[%s11 + $0xb8] sm:$0xff]
    %v1750 = vld [vmem:[%s11 + $0xc0] sm:$0xf]
    %v1751 = vld [vmem:[%s11 + $0xc4] sm:$0xff]
    %v1752 = vld [vmem:[%s11 + $0xcc] sm:$0xff]
    %v1753 = vld [vmem:[%s11 + $0xd4] sm:$0xff]
    %v1754 = vld [vmem:[%s11 + $0xdc] sm:$0xf]
    %v1755 = vld [vmem:[%s11 + $0xe0] sm:$0xff]
    %v1756 = vld [vmem:[%s11 + $0xe8] sm:$0xff]
    %v1757 = vld [vmem:[%s11 + $0xf0] sm:$0xff]
    %v1758 = vld [vmem:[%s11 + $0xf8] sm:$0xf]
    %v1759 = vld [vmem:[%s11 + $0xfc] sm:$0xff]
    %v1760 = vld [vmem:[%s11 + $0x104] sm:$0xff]
    %v1761 = vld [vmem:[%s11 + $0x10c] sm:$0xff]
    %v1762 = vld [vmem:[%s11 + $0x114] sm:$0xf]
    %v1763 = vld [vmem:[%s11 + $0x118] sm:$0xff]
    %v1764 = vld [vmem:[%s11 + $0x120] sm:$0xff]
    %v1765 = vld [vmem:[%s11 + $0x128] sm:$0xff]
    %v1766 = vld [vmem:[%s11 + $0x130] sm:$0xf]
    %v1767 = vld [vmem:[%s11 + $0x134] sm:$0xff]
    %v1768 = vld [vmem:[%s11 + $0x13c] sm:$0xff]
    %v1769 = vld [vmem:[%s11 + $0x144] sm:$0xff]
    %v1770 = vld [vmem:[%s11 + $0x14c] sm:$0xf]
    %v1771 = vld [vmem:[%s11 + $0x150] sm:$0xff]
    %v1772 = vld [vmem:[%s11 + $0x158] sm:$0xff]
    %v1773 = vld [vmem:[%s11 + $0x160] sm:$0xff]
    %v1774 = vld [vmem:[%s11 + $0x168] sm:$0xf]
    %v1775 = vld [vmem:[%s11 + $0x16c] sm:$0xff]
    %v1776 = vld [vmem:[%s11 + $0x174] sm:$0xff]
    %v1777 = vld [vmem:[%s11 + $0x17c] sm:$0xff]
    %v1778 = vld [vmem:[%s11 + $0x184] sm:$0xf]
    %v1779 = vld [vmem:[%s11 + $0x188] sm:$0xff]
    %v1780 = vld [vmem:[%s11 + $0x190] sm:$0xff]
    %v1781 = vld [vmem:[%s11 + $0x198] sm:$0xff]
    %v1782 = vld [vmem:[%s11 + $0x1a0] sm:$0xf]
    %v1783 = vld [vmem:[%s11 + $0x1a4] sm:$0xff]
    %v1784 = vld [vmem:[%s11 + $0x1ac] sm:$0xff]
    %v1785 = vld [vmem:[%s11 + $0x1b4] sm:$0xff]
    %v1786 = vld [vmem:[%s11 + $0x1bc] sm:$0xf]
    %v1787 = vld [vmem:[%s11 + $0x1c0] sm:$0xff]
    %v1788 = vld [vmem:[%s11 + $0x1c8] sm:$0xff]
    %v1789 = vld [vmem:[%s11 + $0x1d0] sm:$0xff]
    %v1790 = vld [vmem:[%s11 + $0x1d8] sm:$0xf]
    %v1791 = vld [vmem:[%s11 + $0x1dc] sm:$0xff]
    %v1792 = vld [vmem:[%s11 + $0x1e4] sm:$0xff]
    %v1793 = vld [vmem:[%s11 + $0x1ec] sm:$0xff]
    %v1794 = vld [vmem:[%s11 + $0x1f4] sm:$0xf]
    %v1795 = vld [vmem:[%s11 + $0x1f8] sm:$0xff]
    %v1796 = vld [vmem:[%s11 + $0x200] sm:$0xff]
    %v1797 = vld [vmem:[%s11 + $0x208] sm:$0xff]
    %v1798 = vld [vmem:[%s11 + $0x210] sm:$0xf]
    %v1799 = vld [vmem:[%s11 + $0x214] sm:$0xff]
    %v1800 = vld [vmem:[%s11 + $0x21c] sm:$0xff]
    %v1801 = vld [vmem:[%s11 + $0x224] sm:$0xff]
    %v1802 = vld [vmem:[%s11 + $0x22c] sm:$0xf]
    %v1803 = vld [vmem:[%s11 + $0x230] sm:$0xff]
    %v1804 = vld [vmem:[%s11 + $0x238] sm:$0xff]
    %v1805 = vld [vmem:[%s11 + $0x240] sm:$0xff]
    %v1806 = vld [vmem:[%s11 + $0x248] sm:$0xf]
    %v1807 = vld [vmem:[%s11 + $0x24c] sm:$0xff]
    %v1808 = vld [vmem:[%s11 + $0x254] sm:$0xff]
    %v1809 = vld [vmem:[%s11 + $0x25c] sm:$0xff]
    %v1810 = vld [vmem:[%s11 + $0x264] sm:$0xf]
    %v1811 = vld [vmem:[%s11 + $0x268] sm:$0xff]
    %v1812 = vld [vmem:[%s11 + $0x270] sm:$0xff]
    %v1813 = vld [vmem:[%s11 + $0x278] sm:$0xff]
    %v1814 = vld [vmem:[%s11 + $0x280] sm:$0xf]
    %v1815 = vld [vmem:[%s11 + $0x284] sm:$0xff]
    %v1816 = vld [vmem:[%s11 + $0x28c] sm:$0xff]
    %v1817 = vld [vmem:[%s11 + $0x294] sm:$0xff]
    %v1818 = vld [vmem:[%s11 + $0x29c] sm:$0xf]
    %v1819 = vld [vmem:[%s11 + $0x2a0] sm:$0xff]
    %v1820 = vld [vmem:[%s11 + $0x2a8] sm:$0xff]
    %v1821 = vld [vmem:[%s11 + $0x2b0] sm:$0xff]
    %v1822 = vld [vmem:[%s11 + $0x2b8] sm:$0xf]
    %v1823 = vld [vmem:[%s11 + $0x2bc] sm:$0xff]
    %v1824 = vld [vmem:[%s11 + $0x2c4] sm:$0xff]
    %v1825 = vld [vmem:[%s11 + $0x2cc] sm:$0xff]
    %v1826 = vld [vmem:[%s11 + $0x2d4] sm:$0xf]
    %v1827 = vld [vmem:[%s11 + $0x2d8] sm:$0xff]
    %v1828 = vld [vmem:[%s11 + $0x2e0] sm:$0xff]
    %v1829 = vld [vmem:[%s11 + $0x2e8] sm:$0xff]
    %v1830 = vld [vmem:[%s11 + $0x2f0] sm:$0xf]
    %v1831 = vld [vmem:[%s11 + $0x2f4] sm:$0xff]
    %v1832 = vld [vmem:[%s11 + $0x2fc] sm:$0xff]
    %v1833 = vld [vmem:[%s11 + $0x304] sm:$0xff]
    %v1834 = vld [vmem:[%s11 + $0x30c] sm:$0xf]
    %v1835 = vld [vmem:[%s11 + $0x310] sm:$0xff]
    %v1836 = vld [vmem:[%s11 + $0x318] sm:$0xff]
    %v1837 = vld [vmem:[%s11 + $0x320] sm:$0xff]
    %v1838 = vld [vmem:[%s11 + $0x328] sm:$0xf]
    %v1839 = vld [vmem:[%s11 + $0x32c] sm:$0xff]
    %v1840 = vld [vmem:[%s11 + $0x334] sm:$0xff]
    %v1841 = vld [vmem:[%s11 + $0x33c] sm:$0xff]
    %v1842 = vld [vmem:[%s11 + $0x344] sm:$0xf]
    %v1843 = vld [vmem:[%s11 + $0x348] sm:$0xff]
    %v1844 = vld [vmem:[%s11 + $0x350] sm:$0xff]
    %v1845 = vld [vmem:[%s11 + $0x358] sm:$0xff]
    %v1846 = vld [vmem:[%s11 + $0x360] sm:$0xf]
    %v1847 = vld [vmem:[%s11 + $0x364] sm:$0xff]
    %v1848 = vld [vmem:[%s11 + $0x36c] sm:$0xff]
    %v1849 = vld [vmem:[%s11 + $0x374] sm:$0xff]
    %v1850 = vld [vmem:[%s11 + $0x37c] sm:$0xf]
    %v1851 = vld [vmem:[%s12] sm:$0x7f]
    %v1853 = vlaneseq
    %v1854 = vshrl.u32 %v1853, 7
    %v1855 = vsub.s32 0, %v1854
    %v1856 = vrot.slane %v1851, %v1855
    %v1857 = vlaneseq
    %v1858 = vshrl.u32 %v1857, 7
    %v1859 = vsub.s32 1, %v1858
    %v1860 = vrot.slane %v1851, %v1859
    %v1861 = vlaneseq
    %v1862 = vshrl.u32 %v1861, 7
    %v1863 = vsub.s32 2, %v1862
    %v1864 = vrot.slane %v1851, %v1863
    %v1865 = vlaneseq
    %v1866 = vshrl.u32 %v1865, 7
    %v1867 = vsub.s32 3, %v1866
    %v1868 = vrot.slane %v1851, %v1867
    %v1869 = vlaneseq
    %v1870 = vshrl.u32 %v1869, 7
    %v1871 = vsub.s32 4, %v1870
    %v1872 = vrot.slane %v1851, %v1871
    %v1873 = vlaneseq
    %v1874 = vshrl.u32 %v1873, 7
    %v1875 = vsub.s32 5, %v1874
    %v1876 = vrot.slane %v1851, %v1875
    %v1877 = vlaneseq
    %v1878 = vshrl.u32 %v1877, 7
    %v1879 = vsub.s32 6, %v1878
    %v1880 = vrot.slane %v1851, %v1879
    %v2016 = vunpack.c.l.b16 %v1723
    %v2017 = vunpack.c.h.b16 %v1723
    %v2018 = vunpack.c.l.b16 %v1724
    %v2019 = vunpack.c.h.b16 %v1724
    %v2020 = vunpack.c.l.b16 %v1725
    %v2021 = vunpack.c.h.b16 %v1725
    %v2022 = vunpack.c.l.b16 %v1726
    %v2023 = vunpack.c.l.b16 %v1727
    %v2024 = vunpack.c.h.b16 %v1727
    %v2025 = vunpack.c.l.b16 %v1728
    %v2026 = vunpack.c.h.b16 %v1728
    %v2027 = vunpack.c.l.b16 %v1729
    %v2028 = vunpack.c.h.b16 %v1729
    %v2029 = vunpack.c.l.b16 %v1730
    %v2030 = vunpack.c.l.b16 %v1731
    %v2031 = vunpack.c.h.b16 %v1731
    %v2032 = vunpack.c.l.b16 %v1732
    %v2033 = vunpack.c.h.b16 %v1732
    %v2034 = vunpack.c.l.b16 %v1733
    %v2035 = vunpack.c.h.b16 %v1733
    %v2036 = vunpack.c.l.b16 %v1734
    %v2037 = vunpack.c.l.b16 %v1735
    %v2038 = vunpack.c.h.b16 %v1735
    %v2039 = vunpack.c.l.b16 %v1736
    %v2040 = vunpack.c.h.b16 %v1736
    %v2041 = vunpack.c.l.b16 %v1737
    %v2042 = vunpack.c.h.b16 %v1737
    %v2043 = vunpack.c.l.b16 %v1738
    %v2044 = vunpack.c.l.b16 %v1739
    %v2045 = vunpack.c.h.b16 %v1739
    %v2046 = vunpack.c.l.b16 %v1740
    %v2047 = vunpack.c.h.b16 %v1740
    %v2048 = vunpack.c.l.b16 %v1741
    %v2049 = vunpack.c.h.b16 %v1741
    %v2050 = vunpack.c.l.b16 %v1742
    %v2051 = vunpack.c.l.b16 %v1743
    %v2052 = vunpack.c.h.b16 %v1743
    %v2053 = vunpack.c.l.b16 %v1744
    %v2054 = vunpack.c.h.b16 %v1744
    %v2055 = vunpack.c.l.b16 %v1745
    %v2056 = vunpack.c.h.b16 %v1745
    %v2057 = vunpack.c.l.b16 %v1746
    %v2058 = vunpack.c.l.b16 %v1747
    %v2059 = vunpack.c.h.b16 %v1747
    %v2060 = vunpack.c.l.b16 %v1748
    %v2061 = vunpack.c.h.b16 %v1748
    %v2062 = vunpack.c.l.b16 %v1749
    %v2063 = vunpack.c.h.b16 %v1749
    %v2064 = vunpack.c.l.b16 %v1750
    %v2065 = vunpack.c.l.b16 %v1751
    %v2066 = vunpack.c.h.b16 %v1751
    %v2067 = vunpack.c.l.b16 %v1752
    %v2068 = vunpack.c.h.b16 %v1752
    %v2069 = vunpack.c.l.b16 %v1753
    %v2070 = vunpack.c.h.b16 %v1753
    %v2071 = vunpack.c.l.b16 %v1754
    %v2072 = vunpack.c.l.b16 %v1755
    %v2073 = vunpack.c.h.b16 %v1755
    %v2074 = vunpack.c.l.b16 %v1756
    %v2075 = vunpack.c.h.b16 %v1756
    %v2076 = vunpack.c.l.b16 %v1757
    %v2077 = vunpack.c.h.b16 %v1757
    %v2078 = vunpack.c.l.b16 %v1758
    %v2079 = vunpack.c.l.b16 %v1759
    %v2080 = vunpack.c.h.b16 %v1759
    %v2081 = vunpack.c.l.b16 %v1760
    %v2082 = vunpack.c.h.b16 %v1760
    %v2083 = vunpack.c.l.b16 %v1761
    %v2084 = vunpack.c.h.b16 %v1761
    %v2085 = vunpack.c.l.b16 %v1762
    %v2086 = vunpack.c.l.b16 %v1763
    %v2087 = vunpack.c.h.b16 %v1763
    %v2088 = vunpack.c.l.b16 %v1764
    %v2089 = vunpack.c.h.b16 %v1764
    %v2090 = vunpack.c.l.b16 %v1765
    %v2091 = vunpack.c.h.b16 %v1765
    %v2092 = vunpack.c.l.b16 %v1766
    %v2093 = vunpack.c.l.b16 %v1767
    %v2094 = vunpack.c.h.b16 %v1767
    %v2095 = vunpack.c.l.b16 %v1768
    %v2096 = vunpack.c.h.b16 %v1768
    %v2097 = vunpack.c.l.b16 %v1769
    %v2098 = vunpack.c.h.b16 %v1769
    %v2099 = vunpack.c.l.b16 %v1770
    %v2100 = vunpack.c.l.b16 %v1771
    %v2101 = vunpack.c.h.b16 %v1771
    %v2102 = vunpack.c.l.b16 %v1772
    %v2103 = vunpack.c.h.b16 %v1772
    %v2104 = vunpack.c.l.b16 %v1773
    %v2105 = vunpack.c.h.b16 %v1773
    %v2106 = vunpack.c.l.b16 %v1774
    %v2107 = vunpack.c.l.b16 %v1775
    %v2108 = vunpack.c.h.b16 %v1775
    %v2109 = vunpack.c.l.b16 %v1776
    %v2110 = vunpack.c.h.b16 %v1776
    %v2111 = vunpack.c.l.b16 %v1777
    %v2112 = vunpack.c.h.b16 %v1777
    %v2113 = vunpack.c.l.b16 %v1778
    %v2114 = vunpack.c.l.b16 %v1779
    %v2115 = vunpack.c.h.b16 %v1779
    %v2116 = vunpack.c.l.b16 %v1780
    %v2117 = vunpack.c.h.b16 %v1780
    %v2118 = vunpack.c.l.b16 %v1781
    %v2119 = vunpack.c.h.b16 %v1781
    %v2120 = vunpack.c.l.b16 %v1782
    %v2121 = vunpack.c.l.b16 %v1783
    %v2122 = vunpack.c.h.b16 %v1783
    %v2123 = vunpack.c.l.b16 %v1784
    %v2124 = vunpack.c.h.b16 %v1784
    %v2125 = vunpack.c.l.b16 %v1785
    %v2126 = vunpack.c.h.b16 %v1785
    %v2127 = vunpack.c.l.b16 %v1786
    %v2128 = vunpack.c.l.b16 %v1787
    %v2129 = vunpack.c.h.b16 %v1787
    %v2130 = vunpack.c.l.b16 %v1788
    %v2131 = vunpack.c.h.b16 %v1788
    %v2132 = vunpack.c.l.b16 %v1789
    %v2133 = vunpack.c.h.b16 %v1789
    %v2134 = vunpack.c.l.b16 %v1790
    %v2135 = vunpack.c.l.b16 %v1791
    %v2136 = vunpack.c.h.b16 %v1791
    %v2137 = vunpack.c.l.b16 %v1792
    %v2138 = vunpack.c.h.b16 %v1792
    %v2139 = vunpack.c.l.b16 %v1793
    %v2140 = vunpack.c.h.b16 %v1793
    %v2141 = vunpack.c.l.b16 %v1794
    %v2142 = vunpack.c.l.b16 %v1795
    %v2143 = vunpack.c.h.b16 %v1795
    %v2144 = vunpack.c.l.b16 %v1796
    %v2145 = vunpack.c.h.b16 %v1796
    %v2146 = vunpack.c.l.b16 %v1797
    %v2147 = vunpack.c.h.b16 %v1797
    %v2148 = vunpack.c.l.b16 %v1798
    %v2149 = vunpack.c.l.b16 %v1799
    %v2150 = vunpack.c.h.b16 %v1799
    %v2151 = vunpack.c.l.b16 %v1800
    %v2152 = vunpack.c.h.b16 %v1800
    %v2153 = vunpack.c.l.b16 %v1801
    %v2154 = vunpack.c.h.b16 %v1801
    %v2155 = vunpack.c.l.b16 %v1802
    %v2156 = vunpack.c.l.b16 %v1803
    %v2157 = vunpack.c.h.b16 %v1803
    %v2158 = vunpack.c.l.b16 %v1804
    %v2159 = vunpack.c.h.b16 %v1804
    %v2160 = vunpack.c.l.b16 %v1805
    %v2161 = vunpack.c.h.b16 %v1805
    %v2162 = vunpack.c.l.b16 %v1806
    %v2163 = vunpack.c.l.b16 %v1807
    %v2164 = vunpack.c.h.b16 %v1807
    %v2165 = vunpack.c.l.b16 %v1808
    %v2166 = vunpack.c.h.b16 %v1808
    %v2167 = vunpack.c.l.b16 %v1809
    %v2168 = vunpack.c.h.b16 %v1809
    %v2169 = vunpack.c.l.b16 %v1810
    %v2170 = vunpack.c.l.b16 %v1811
    %v2171 = vunpack.c.h.b16 %v1811
    %v2172 = vunpack.c.l.b16 %v1812
    %v2173 = vunpack.c.h.b16 %v1812
    %v2174 = vunpack.c.l.b16 %v1813
    %v2175 = vunpack.c.h.b16 %v1813
    %v2176 = vunpack.c.l.b16 %v1814
    %v2177 = vunpack.c.l.b16 %v1815
    %v2178 = vunpack.c.h.b16 %v1815
    %v2179 = vunpack.c.l.b16 %v1816
    %v2180 = vunpack.c.h.b16 %v1816
    %v2181 = vunpack.c.l.b16 %v1817
    %v2182 = vunpack.c.h.b16 %v1817
    %v2183 = vunpack.c.l.b16 %v1818
    %v2184 = vunpack.c.l.b16 %v1819
    %v2185 = vunpack.c.h.b16 %v1819
    %v2186 = vunpack.c.l.b16 %v1820
    %v2187 = vunpack.c.h.b16 %v1820
    %v2188 = vunpack.c.l.b16 %v1821
    %v2189 = vunpack.c.h.b16 %v1821
    %v2190 = vunpack.c.l.b16 %v1822
    %v2191 = vunpack.c.l.b16 %v1823
    %v2192 = vunpack.c.h.b16 %v1823
    %v2193 = vunpack.c.l.b16 %v1824
    %v2194 = vunpack.c.h.b16 %v1824
    %v2195 = vunpack.c.l.b16 %v1825
    %v2196 = vunpack.c.h.b16 %v1825
    %v2197 = vunpack.c.l.b16 %v1826
    %v2198 = vunpack.c.l.b16 %v1827
    %v2199 = vunpack.c.h.b16 %v1827
    %v2200 = vunpack.c.l.b16 %v1828
    %v2201 = vunpack.c.h.b16 %v1828
    %v2202 = vunpack.c.l.b16 %v1829
    %v2203 = vunpack.c.h.b16 %v1829
    %v2204 = vunpack.c.l.b16 %v1830
    %v2205 = vunpack.c.l.b16 %v1831
    %v2206 = vunpack.c.h.b16 %v1831
    %v2207 = vunpack.c.l.b16 %v1832
    %v2208 = vunpack.c.h.b16 %v1832
    %v2209 = vunpack.c.l.b16 %v1833
    %v2210 = vunpack.c.h.b16 %v1833
    %v2211 = vunpack.c.l.b16 %v1834
    %v2212 = vunpack.c.l.b16 %v1835
    %v2213 = vunpack.c.h.b16 %v1835
    %v2214 = vunpack.c.l.b16 %v1836
    %v2215 = vunpack.c.h.b16 %v1836
    %v2216 = vunpack.c.l.b16 %v1837
    %v2217 = vunpack.c.h.b16 %v1837
    %v2218 = vunpack.c.l.b16 %v1838
    %v2219 = vunpack.c.l.b16 %v1839
    %v2220 = vunpack.c.h.b16 %v1839
    %v2221 = vunpack.c.l.b16 %v1840
    %v2222 = vunpack.c.h.b16 %v1840
    %v2223 = vunpack.c.l.b16 %v1841
    %v2224 = vunpack.c.h.b16 %v1841
    %v2225 = vunpack.c.l.b16 %v1842
    %v2226 = vunpack.c.l.b16 %v1843
    %v2227 = vunpack.c.h.b16 %v1843
    %v2228 = vunpack.c.l.b16 %v1844
    %v2229 = vunpack.c.h.b16 %v1844
    %v2230 = vunpack.c.l.b16 %v1845
    %v2231 = vunpack.c.h.b16 %v1845
    %v2232 = vunpack.c.l.b16 %v1846
    %v2233 = vunpack.c.l.b16 %v1847
    %v2234 = vunpack.c.h.b16 %v1847
    %v2235 = vunpack.c.l.b16 %v1848
    %v2236 = vunpack.c.h.b16 %v1848
    %v2237 = vunpack.c.l.b16 %v1849
    %v2238 = vunpack.c.h.b16 %v1849
    %v2239 = vunpack.c.l.b16 %v1850
    %v2240 = vpack.c.b16 %v2023, %v2016
    %v2241 = vpack.c.b16 %v2024, %v2017
    %v2242 = vpack.c.b16 %v2025, %v2018
    %v2243 = vpack.c.b16 %v2026, %v2019
    %v2244 = vpack.c.b16 %v2027, %v2020
    %v2245 = vpack.c.b16 %v2028, %v2021
    %v2246 = vpack.c.b16 %v2029, %v2022
    %v2247 = vpack.c.b16 %v2037, %v2030
    %v2248 = vpack.c.b16 %v2038, %v2031
    %v2249 = vpack.c.b16 %v2039, %v2032
    %v2250 = vpack.c.b16 %v2040, %v2033
    %v2251 = vpack.c.b16 %v2041, %v2034
    %v2252 = vpack.c.b16 %v2042, %v2035
    %v2253 = vpack.c.b16 %v2043, %v2036
    %v2254 = vpack.c.b16 %v2051, %v2044
    %v2255 = vpack.c.b16 %v2052, %v2045
    %v2256 = vpack.c.b16 %v2053, %v2046
    %v2257 = vpack.c.b16 %v2054, %v2047
    %v2258 = vpack.c.b16 %v2055, %v2048
    %v2259 = vpack.c.b16 %v2056, %v2049
    %v2260 = vpack.c.b16 %v2057, %v2050
    %v2261 = vpack.c.b16 %v2065, %v2058
    %v2262 = vpack.c.b16 %v2066, %v2059
    %v2263 = vpack.c.b16 %v2067, %v2060
    %v2264 = vpack.c.b16 %v2068, %v2061
    %v2265 = vpack.c.b16 %v2069, %v2062
    %v2266 = vpack.c.b16 %v2070, %v2063
    %v2267 = vpack.c.b16 %v2071, %v2064
    %v2268 = vpack.c.b16 %v2079, %v2072
    %v2269 = vpack.c.b16 %v2080, %v2073
    %v2270 = vpack.c.b16 %v2081, %v2074
    %v2271 = vpack.c.b16 %v2082, %v2075
    %v2272 = vpack.c.b16 %v2083, %v2076
    %v2273 = vpack.c.b16 %v2084, %v2077
    %v2274 = vpack.c.b16 %v2085, %v2078
    %v2275 = vpack.c.b16 %v2093, %v2086
    %v2276 = vpack.c.b16 %v2094, %v2087
    %v2277 = vpack.c.b16 %v2095, %v2088
    %v2278 = vpack.c.b16 %v2096, %v2089
    %v2279 = vpack.c.b16 %v2097, %v2090
    %v2280 = vpack.c.b16 %v2098, %v2091
    %v2281 = vpack.c.b16 %v2099, %v2092
    %v2282 = vpack.c.b16 %v2107, %v2100
    %v2283 = vpack.c.b16 %v2108, %v2101
    %v2284 = vpack.c.b16 %v2109, %v2102
    %v2285 = vpack.c.b16 %v2110, %v2103
    %v2286 = vpack.c.b16 %v2111, %v2104
    %v2287 = vpack.c.b16 %v2112, %v2105
    %v2288 = vpack.c.b16 %v2113, %v2106
    %v2289 = vpack.c.b16 %v2121, %v2114
    %v2290 = vpack.c.b16 %v2122, %v2115
    %v2291 = vpack.c.b16 %v2123, %v2116
    %v2292 = vpack.c.b16 %v2124, %v2117
    %v2293 = vpack.c.b16 %v2125, %v2118
    %v2294 = vpack.c.b16 %v2126, %v2119
    %v2295 = vpack.c.b16 %v2127, %v2120
    %v2296 = vpack.c.b16 %v2135, %v2128
    %v2297 = vpack.c.b16 %v2136, %v2129
    %v2298 = vpack.c.b16 %v2137, %v2130
    %v2299 = vpack.c.b16 %v2138, %v2131
    %v2300 = vpack.c.b16 %v2139, %v2132
    %v2301 = vpack.c.b16 %v2140, %v2133
    %v2302 = vpack.c.b16 %v2141, %v2134
    %v2303 = vpack.c.b16 %v2149, %v2142
    %v2304 = vpack.c.b16 %v2150, %v2143
    %v2305 = vpack.c.b16 %v2151, %v2144
    %v2306 = vpack.c.b16 %v2152, %v2145
    %v2307 = vpack.c.b16 %v2153, %v2146
    %v2308 = vpack.c.b16 %v2154, %v2147
    %v2309 = vpack.c.b16 %v2155, %v2148
    %v2310 = vpack.c.b16 %v2163, %v2156
    %v2311 = vpack.c.b16 %v2164, %v2157
    %v2312 = vpack.c.b16 %v2165, %v2158
    %v2313 = vpack.c.b16 %v2166, %v2159
    %v2314 = vpack.c.b16 %v2167, %v2160
    %v2315 = vpack.c.b16 %v2168, %v2161
    %v2316 = vpack.c.b16 %v2169, %v2162
    %v2317 = vpack.c.b16 %v2177, %v2170
    %v2318 = vpack.c.b16 %v2178, %v2171
    %v2319 = vpack.c.b16 %v2179, %v2172
    %v2320 = vpack.c.b16 %v2180, %v2173
    %v2321 = vpack.c.b16 %v2181, %v2174
    %v2322 = vpack.c.b16 %v2182, %v2175
    %v2323 = vpack.c.b16 %v2183, %v2176
    %v2324 = vpack.c.b16 %v2191, %v2184
    %v2325 = vpack.c.b16 %v2192, %v2185
    %v2326 = vpack.c.b16 %v2193, %v2186
    %v2327 = vpack.c.b16 %v2194, %v2187
    %v2328 = vpack.c.b16 %v2195, %v2188
    %v2329 = vpack.c.b16 %v2196, %v2189
    %v2330 = vpack.c.b16 %v2197, %v2190
    %v2331 = vpack.c.b16 %v2205, %v2198
    %v2332 = vpack.c.b16 %v2206, %v2199
    %v2333 = vpack.c.b16 %v2207, %v2200
    %v2334 = vpack.c.b16 %v2208, %v2201
    %v2335 = vpack.c.b16 %v2209, %v2202
    %v2336 = vpack.c.b16 %v2210, %v2203
    %v2337 = vpack.c.b16 %v2211, %v2204
    %v2338 = vpack.c.b16 %v2219, %v2212
    %v2339 = vpack.c.b16 %v2220, %v2213
    %v2340 = vpack.c.b16 %v2221, %v2214
    %v2341 = vpack.c.b16 %v2222, %v2215
    %v2342 = vpack.c.b16 %v2223, %v2216
    %v2343 = vpack.c.b16 %v2224, %v2217
    %v2344 = vpack.c.b16 %v2225, %v2218
    %v2345 = vpack.c.b16 %v2233, %v2226
    %v2346 = vpack.c.b16 %v2234, %v2227
    %v2347 = vpack.c.b16 %v2235, %v2228
    %v2348 = vpack.c.b16 %v2236, %v2229
    %v2349 = vpack.c.b16 %v2237, %v2230
    %v2350 = vpack.c.b16 %v2238, %v2231
    %v2351 = vpack.c.b16 %v2239, %v2232
    %2464 = vmatprep.subr.bf16.mxu0 %v2290
    %2465 = vmatpush1.bf16.msra.mxu0 %v2289
    %2466 = vmatprep.subr.bf16.mxu0 %v2283
    %2467 = vmatpush1.bf16.msra.mxu0 %v2282
    %2468 = vmatprep.subr.bf16.mxu0 %v2276
    %2469 = vmatpush1.bf16.msra.mxu0 %v2275
    %2470 = vmatprep.subr.bf16.mxu0 %v2269
    %2471 = vmatpush1.bf16.msra.mxu0 %v2268
    %2472 = vmatprep.subr.bf16.mxu0 %v2262
    %2473 = vmatpush1.bf16.msra.mxu0 %v2261
    %2474 = vmatprep.subr.bf16.mxu0 %v2255
    %2475 = vmatpush1.bf16.msra.mxu0 %v2254
    %2476 = vmatprep.subr.bf16.mxu0 %v2248
    %2477 = vmatpush1.bf16.msra.mxu0 %v2247
    %2478 = vmatprep.subr.bf16.mxu0 %v2241
    %2479 = vmatpush1.bf16.msra.mxu0 %v2240
    %2480 = vmatprep.subr.bf16.mxu0 %v2346
    %2481 = vmatpush2.bf16.msra.mxu0 %v2345
    %2482 = vmatprep.subr.bf16.mxu0 %v2339
    %2483 = vmatpush2.bf16.msra.mxu0 %v2338
    %2484 = vmatprep.subr.bf16.mxu0 %v2332
    %2485 = vmatpush2.bf16.msra.mxu0 %v2331
    %2486 = vmatprep.subr.bf16.mxu0 %v2325
    %2487 = vmatpush2.bf16.msra.mxu0 %v2324
    %2488 = vmatprep.subr.bf16.mxu0 %v2318
    %2489 = vmatpush2.bf16.msra.mxu0 %v2317
    %2490 = vmatprep.subr.bf16.mxu0 %v2311
    %2491 = vmatpush2.bf16.msra.mxu0 %v2310
    %2492 = vmatprep.subr.bf16.mxu0 %v2304
    %2493 = vmatpush2.bf16.msra.mxu0 %v2303
    %2494 = vmatprep.subr.bf16.mxu0 %v2297
    %2495 = vmatpush2.bf16.msra.mxu0 %v2296
    %2496 = vmatprep.mubr.bf16.mxu0 %v1722
    %2497 = vmatmul.mubr.bf16.gmra.mxu0 %v1721
    %v2498 = vpop.f32.mrf.mxu0
    %v2499 = vadd.f32 %v1856, %v2498
    %v2500 = vpop.f32.mrf.mxu0
    %v2501 = vadd.f32 %v1860, %v2500
    %v2502 = vpop.f32.mrf.mxu0
    %v2503 = vadd.f32 %v1856, %v2502
    %v2504 = vpop.f32.mrf.mxu0
    %v2505 = vadd.f32 %v1860, %v2504
    %2506 = vdwg.mxu0
    %2507 = vmatprep.subr.bf16.mxu0 %v2292
    %2508 = vmatpush1.bf16.msra.mxu0 %v2291
    %2509 = vmatprep.subr.bf16.mxu0 %v2285
    %2510 = vmatpush1.bf16.msra.mxu0 %v2284
    %2511 = vmatprep.subr.bf16.mxu0 %v2278
    %2512 = vmatpush1.bf16.msra.mxu0 %v2277
    %2513 = vmatprep.subr.bf16.mxu0 %v2271
    %2514 = vmatpush1.bf16.msra.mxu0 %v2270
    %2515 = vmatprep.subr.bf16.mxu0 %v2264
    %2516 = vmatpush1.bf16.msra.mxu0 %v2263
    %2517 = vmatprep.subr.bf16.mxu0 %v2257
    %2518 = vmatpush1.bf16.msra.mxu0 %v2256
    %2519 = vmatprep.subr.bf16.mxu0 %v2250
    %2520 = vmatpush1.bf16.msra.mxu0 %v2249
    %2521 = vmatprep.subr.bf16.mxu0 %v2243
    %2522 = vmatpush1.bf16.msra.mxu0 %v2242
    %2523 = vmatprep.subr.bf16.mxu0 %v2348
    %2524 = vmatpush2.bf16.msra.mxu0 %v2347
    %2525 = vmatprep.subr.bf16.mxu0 %v2341
    %2526 = vmatpush2.bf16.msra.mxu0 %v2340
    %2527 = vmatprep.subr.bf16.mxu0 %v2334
    %2528 = vmatpush2.bf16.msra.mxu0 %v2333
    %2529 = vmatprep.subr.bf16.mxu0 %v2327
    %2530 = vmatpush2.bf16.msra.mxu0 %v2326
    %2531 = vmatprep.subr.bf16.mxu0 %v2320
    %2532 = vmatpush2.bf16.msra.mxu0 %v2319
    %2533 = vmatprep.subr.bf16.mxu0 %v2313
    %2534 = vmatpush2.bf16.msra.mxu0 %v2312
    %2535 = vmatprep.subr.bf16.mxu0 %v2306
    %2536 = vmatpush2.bf16.msra.mxu0 %v2305
    %2537 = vmatprep.subr.bf16.mxu0 %v2299
    %2538 = vmatpush2.bf16.msra.mxu0 %v2298
    %2539 = vmatprep.mubr.bf16.mxu0 %v1722
    %2540 = vmatmul.mubr.bf16.gmra.mxu0 %v1721
    %v2541 = vpop.f32.mrf.mxu0
    %v2542 = vadd.f32 %v1864, %v2541
    %v2543 = vpop.f32.mrf.mxu0
    %v2544 = vadd.f32 %v1868, %v2543
    %v2545 = vpop.f32.mrf.mxu0
    %v2546 = vadd.f32 %v1864, %v2545
    %v2547 = vpop.f32.mrf.mxu0
    %v2548 = vadd.f32 %v1868, %v2547
    %2549 = vdwg.mxu0
    %2550 = vmatprep.subr.bf16.mxu0 %v2294
    %2551 = vmatpush1.bf16.msra.mxu0 %v2293
    %2552 = vmatprep.subr.bf16.mxu0 %v2287
    %2553 = vmatpush1.bf16.msra.mxu0 %v2286
    %2554 = vmatprep.subr.bf16.mxu0 %v2280
    %2555 = vmatpush1.bf16.msra.mxu0 %v2279
    %2556 = vmatprep.subr.bf16.mxu0 %v2273
    %2557 = vmatpush1.bf16.msra.mxu0 %v2272
    %2558 = vmatprep.subr.bf16.mxu0 %v2266
    %2559 = vmatpush1.bf16.msra.mxu0 %v2265
    %2560 = vmatprep.subr.bf16.mxu0 %v2259
    %2561 = vmatpush1.bf16.msra.mxu0 %v2258
    %2562 = vmatprep.subr.bf16.mxu0 %v2252
    %2563 = vmatpush1.bf16.msra.mxu0 %v2251
    %2564 = vmatprep.subr.bf16.mxu0 %v2245
    %2565 = vmatpush1.bf16.msra.mxu0 %v2244
    %2566 = vmatprep.subr.bf16.mxu0 %v2350
    %2567 = vmatpush2.bf16.msra.mxu0 %v2349
    %2568 = vmatprep.subr.bf16.mxu0 %v2343
    %2569 = vmatpush2.bf16.msra.mxu0 %v2342
    %2570 = vmatprep.subr.bf16.mxu0 %v2336
    %2571 = vmatpush2.bf16.msra.mxu0 %v2335
    %2572 = vmatprep.subr.bf16.mxu0 %v2329
    %2573 = vmatpush2.bf16.msra.mxu0 %v2328
    %2574 = vmatprep.subr.bf16.mxu0 %v2322
    %2575 = vmatpush2.bf16.msra.mxu0 %v2321
    %2576 = vmatprep.subr.bf16.mxu0 %v2315
    %2577 = vmatpush2.bf16.msra.mxu0 %v2314
    %2578 = vmatprep.subr.bf16.mxu0 %v2308
    %2579 = vmatpush2.bf16.msra.mxu0 %v2307
    %2580 = vmatprep.subr.bf16.mxu0 %v2301
    %2581 = vmatpush2.bf16.msra.mxu0 %v2300
    %2582 = vmatprep.mubr.bf16.mxu0 %v1722
    %2583 = vmatmul.mubr.bf16.gmra.mxu0 %v1721
    %v2584 = vpop.f32.mrf.mxu0
    %v2585 = vadd.f32 %v1872, %v2584
    %v2586 = vpop.f32.mrf.mxu0
    %v2587 = vadd.f32 %v1876, %v2586
    %v2588 = vpop.f32.mrf.mxu0
    %v2589 = vadd.f32 %v1872, %v2588
    %v2590 = vpop.f32.mrf.mxu0
    %v2591 = vadd.f32 %v1876, %v2590
    %2592 = vdwg.mxu0
    %2593 = vmatprep.subr.bf16.mxu0 0
    %2594 = vmatpush1.bf16.msra.mxu0 %v2295
    %2595 = vmatprep.subr.bf16.mxu0 0
    %2596 = vmatpush1.bf16.msra.mxu0 %v2288
    %2597 = vmatprep.subr.bf16.mxu0 0
    %2598 = vmatpush1.bf16.msra.mxu0 %v2281
    %2599 = vmatprep.subr.bf16.mxu0 0
    %2600 = vmatpush1.bf16.msra.mxu0 %v2274
    %2601 = vmatprep.subr.bf16.mxu0 0
    %2602 = vmatpush1.bf16.msra.mxu0 %v2267
    %2603 = vmatprep.subr.bf16.mxu0 0
    %2604 = vmatpush1.bf16.msra.mxu0 %v2260
    %2605 = vmatprep.subr.bf16.mxu0 0
    %2606 = vmatpush1.bf16.msra.mxu0 %v2253
    %2607 = vmatprep.subr.bf16.mxu0 0
    %2608 = vmatpush1.bf16.msra.mxu0 %v2246
    %2609 = vmatprep.subr.bf16.mxu0 0
    %2610 = vmatpush2.bf16.msra.mxu0 %v2351
    %2611 = vmatprep.subr.bf16.mxu0 0
    %2612 = vmatpush2.bf16.msra.mxu0 %v2344
    %2613 = vmatprep.subr.bf16.mxu0 0
    %2614 = vmatpush2.bf16.msra.mxu0 %v2337
    %2615 = vmatprep.subr.bf16.mxu0 0
    %2616 = vmatpush2.bf16.msra.mxu0 %v2330
    %2617 = vmatprep.subr.bf16.mxu0 0
    %2618 = vmatpush2.bf16.msra.mxu0 %v2323
    %2619 = vmatprep.subr.bf16.mxu0 0
    %2620 = vmatpush2.bf16.msra.mxu0 %v2316
    %2621 = vmatprep.subr.bf16.mxu0 0
    %2622 = vmatpush2.bf16.msra.mxu0 %v2309
    %2623 = vmatprep.subr.bf16.mxu0 0
    %2624 = vmatpush2.bf16.msra.mxu0 %v2302
    %2625 = vmatprep.mubr.bf16.mxu0 %v1722
    %2626 = vmatmul.mubr.bf16.gmra.mxu0 %v1721
    %v2627 = vpop.f32.mrf.mxu0
    %v2628 = vadd.f32 %v1880, %v2627
    %v2629 = vpop.f32.mrf.mxu0
    %v2630 = vpop.f32.mrf.mxu0
    %v2631 = vadd.f32 %v1880, %v2630
    %v2632 = vpop.f32.mrf.mxu0
    %2633 = vdwg.mxu0
    %v2634 = vmul.f32 %v2499, 0.5
    %v2635 = vmul.f32 %v2501, 0.5
    %v2636 = vmul.f32 %v2542, 0.5
    %v2637 = vmul.f32 %v2544, 0.5
    %v2638 = vmul.f32 %v2585, 0.5
    %v2639 = vmul.f32 %v2587, 0.5
    %v2640 = vmul.f32 %v2628, 0.5
    %v2641 = vmul.f32 %v2503, 0.5
    %v2642 = vmul.f32 %v2505, 0.5
    %v2643 = vmul.f32 %v2546, 0.5
    %v2644 = vmul.f32 %v2548, 0.5
    %v2645 = vmul.f32 %v2589, 0.5
    %v2646 = vmul.f32 %v2591, 0.5
    %v2647 = vmul.f32 %v2631, 0.5
    %v2648 = vtanh.pop %v2634
    %v2649 = vtanh.pop %v2635
    %v2650 = vtanh.pop %v2636
    %v2651 = vtanh.pop %v2637
    %v2652 = vtanh.pop %v2638
    %v2653 = vtanh.pop %v2639
    %v2654 = vtanh.pop %v2640
    %v2655 = vtanh.pop %v2641
    %v2656 = vtanh.pop %v2642
    %v2657 = vtanh.pop %v2643
    %v2658 = vtanh.pop %v2644
    %v2659 = vtanh.pop %v2645
    %v2660 = vtanh.pop %v2646
    %v2661 = vtanh.pop %v2647
    %v2662 = vadd.f32 %v2648, 1.0
    %v2663 = vadd.f32 %v2649, 1.0
    %v2664 = vadd.f32 %v2650, 1.0
    %v2665 = vadd.f32 %v2651, 1.0
    %v2666 = vadd.f32 %v2652, 1.0
    %v2667 = vadd.f32 %v2653, 1.0
    %v2668 = vadd.f32 %v2654, 1.0
    %v2669 = vadd.f32 %v2655, 1.0
    %v2670 = vadd.f32 %v2656, 1.0
    %v2671 = vadd.f32 %v2657, 1.0
    %v2672 = vadd.f32 %v2658, 1.0
    %v2673 = vadd.f32 %v2659, 1.0
    %v2674 = vadd.f32 %v2660, 1.0
    %v2675 = vadd.f32 %v2661, 1.0
    %v2676 = vmul.f32 %v2662, 0.5
    %v2677 = vmul.f32 %v2663, 0.5
    %v2678 = vmul.f32 %v2664, 0.5
    %v2679 = vmul.f32 %v2665, 0.5
    %v2680 = vmul.f32 %v2666, 0.5
    %v2681 = vmul.f32 %v2667, 0.5
    %v2682 = vmul.f32 %v2668, 0.5
    %v2683 = vmul.f32 %v2669, 0.5
    %v2684 = vmul.f32 %v2670, 0.5
    %v2685 = vmul.f32 %v2671, 0.5
    %v2686 = vmul.f32 %v2672, 0.5
    %v2687 = vmul.f32 %v2673, 0.5
    %v2688 = vmul.f32 %v2674, 0.5
    %v2689 = vmul.f32 %v2675, 0.5
    %v2690 = vpack.c.bf16 %v2683, %v2676
    %v2691 = vpack.c.bf16 %v2684, %v2677
    %v2692 = vpack.c.bf16 %v2685, %v2678
    %v2693 = vpack.c.bf16 %v2686, %v2679
    %v2694 = vpack.c.bf16 %v2687, %v2680
    %v2695 = vpack.c.bf16 %v2688, %v2681
    %v2696 = vpack.c.bf16 %v2689, %v2682
    %v2704 = vunpack.c.l.b16 %v2690
    %v2705 = vunpack.c.l.b16 %v2691
    %v2706 = vunpack.c.l.b16 %v2692
    %v2707 = vunpack.c.l.b16 %v2693
    %v2708 = vunpack.c.l.b16 %v2694
    %v2709 = vunpack.c.l.b16 %v2695
    %v2710 = vunpack.c.l.b16 %v2696
    %v2711 = vunpack.c.h.b16 %v2690
    %v2712 = vunpack.c.h.b16 %v2691
    %v2713 = vunpack.c.h.b16 %v2692
    %v2714 = vunpack.c.h.b16 %v2693
    %v2715 = vunpack.c.h.b16 %v2694
    %v2716 = vunpack.c.h.b16 %v2695
    %v2717 = vunpack.c.h.b16 %v2696
    %v2718 = vpack.c.b16 %v2705, %v2704
    %v2719 = vpack.c.b16 %v2707, %v2706
    %v2720 = vpack.c.b16 %v2709, %v2708
    %v2721 = vpack.c.b16 %v2710, %v2710
    %v2722 = vpack.c.b16 %v2712, %v2711
    %v2723 = vpack.c.b16 %v2714, %v2713
    %v2724 = vpack.c.b16 %v2716, %v2715
    %v2725 = vpack.c.b16 %v2717, %v2717
    %2734 = vst [vmem:[#allocation2] sm:$0xff] %v2718
    %2735 = vst [vmem:[#allocation2 + $0x8] sm:$0xff] %v2719
    %2736 = vst [vmem:[#allocation2 + $0x10] sm:$0xff] %v2720
    %vm2737 = vcmask 125952
    %2738 = vst.msk [vmem:[#allocation2 + $0x18] sm:$0xf] %vm2737, %v2721
    %2739 = vst [vmem:[#allocation2 + $0x1c] sm:$0xff] %v2722
    %2740 = vst [vmem:[#allocation2 + $0x24] sm:$0xff] %v2723
    %2741 = vst [vmem:[#allocation2 + $0x2c] sm:$0xff] %v2724
    %2742 = vst.msk [vmem:[#allocation2 + $0x34] sm:$0xf] %vm2737, %v2725
    // Predicated region
    $region54: #{logic_vae_forward.1} parent=1 // pred_check
      _
    $region55: #{logic_vae_forward.1} parent=1 // pred_check_branch
      %2744 = sbr.rel (0) target = $region57
    $region56: #{logic_vae_forward.1} parent=1 // pred_region
      %s2746 = ssub.s32 896, 896
      %2747 = vsyncadd [#allocation3], %s2746
      %s2748 = sshll.u32 [#allocation2], 4
      %s2749 = int_to_ptr.vmem [resolvable:$true] %s2748
      %2754 = dma.vmem_to_hbm [thread:$0]  %s2749, 896, %s13, [#allocation3], 448, 448, 28
    $region57: #{logic_vae_forward.1} parent=1 // pred_fallthru
      _
    // Predicated region
    $region58: #{logic_vae_forward.1} parent=1 // pred_check
      _
    $region59: #{logic_vae_forward.1} parent=1 // pred_check_branch
      %2756 = sbr.rel (0) target = $region61
    $region60: #{logic_vae_forward.1} parent=1 // pred_region
      %s2758 = ssub.s32 128, 128
      %2759 = vsyncadd [#allocation5], %s2758
      %s2760 = sshll.u32 [#allocation4], 4
      %s2761 = int_to_ptr.vmem [resolvable:$true] %s2760
      %2766 = dma.vmem_to_hbm [thread:$0]  %s2761, 128, %s14, [#allocation5], 64, 64, 4
    $region61: #{logic_vae_forward.1} parent=1 // pred_fallthru
      _
    // Predicated region
    $region62: #{logic_vae_forward.1} parent=1 // pred_check
      _
    $region63: #{logic_vae_forward.1} parent=1 // pred_check_branch
      %2768 = sbr.rel (0) target = $region65
    $region64: #{logic_vae_forward.1} parent=1 // pred_region
      %2769 = dma.done [#allocation3], 896
    $region65: #{logic_vae_forward.1} parent=1 // pred_fallthru
      _
    // Predicated region
    $region66: #{logic_vae_forward.1} parent=1 // pred_check
      _
    $region67: #{logic_vae_forward.1} parent=1 // pred_check_branch
      %2771 = sbr.rel (0) target = $region69
    $region68: #{logic_vae_forward.1} parent=1 // pred_region
      %2772 = dma.done [#allocation5], 128
    $region69: #{logic_vae_forward.1} parent=1 // pred_fallthru
      _
    %2773 = vsyncpa [#allocation3], 1
    %2774 = vsyncpa [#allocation5], 1

</llo_original>
